<compile_context>
chip_gen: v5e
topology: v5e:2x2
jax: 0.10.0
libtpu: 0.0.40
codegen_flags: <defaults>
</compile_context>

<pallas_src>
import functools

import jax
import jax.numpy as jnp
import numpy as np
from jax import lax
from jax.experimental import pallas as pl
from jax.experimental.pallas import tpu as pltpu


# ----------------------------------------------------------------------------
# Fused Pallas kernel: all encoder layers + final vocab projection
# ----------------------------------------------------------------------------
def _transformer_kernel(x_ref, wqkv_ref, wo_ref, w1_ref, w2_ref, sm_ref,
                        wfc_ref, bfc_ref, o_ref, *,
                        num_layers, num_heads, head_dim, hidden_dim, ff_dim,
                        mm_dtype):
    H, F = hidden_dim, ff_dim
    bb, S = x_ref.shape[0], x_ref.shape[1]
    rows = bb * S
    f32 = jnp.float32

    def mm(a, w):
        # Activations cast to the MXU dtype (weights already stored in it);
        # accumulation stays f32 on the MXU result path.
        return jnp.dot(a.astype(mm_dtype), w, preferred_element_type=f32)

    def layer_norm(y, g, b):
        # Single-pass LN: mean and mean-of-squares are independent reductions
        # (no serialized (y - mu)^2 intermediate) -> less XLU traffic.
        mu = jnp.mean(y, axis=-1, keepdims=True)
        ms = jnp.mean(y * y, axis=-1, keepdims=True)
        var = ms - mu * mu
        return (y - mu) * lax.rsqrt(var + 1e-5) * g + b

    # Fold (batch_block, seq) -> rows so every projection/FFN matmul gets the
    # largest possible M dimension.
    x2 = x_ref[...].reshape(rows, H)                       # [rows, H] f32

    # Static unroll: num_layers is tiny here.  For deep models switch to a
    # lax.fori_loop / layer grid axis to bound live ranges (see TODO above).
    for l in range(num_layers):
        sm = sm_ref[l]                                     # [8, P] packed f32
        bqkv = sm[0:1, :3 * H]
        bo = sm[1:2, :H]
        g1, be1 = sm[2:3, :H], sm[3:4, :H]
        b1 = sm[4:5, :F]
        b2 = sm[5:6, :H]
        g2, be2 = sm[6:7, :H], sm[7:8, :H]

        # Fused QKV projection for all rows at once (single MXU pass).
        # Wq / bq were pre-scaled by 1/sqrt(head_dim) on the host.
        qkv = mm(x2, wqkv_ref[l]) + bqkv                   # [rows, 3H] f32
        qkv3 = qkv.reshape(bb, S, 3 * H)                   # [bb, S, 3H]

        # Per-head attention, accumulated straight into the Wo projection:
        # no lane-minor concat of 8-wide head slabs, each head's output is
        # consumed immediately (bounded live ranges).
        attn = bo                                          # (1, H), broadcasts
        for h in range(num_heads):                         # static, few heads
            lo = h * head_dim
            qh = qkv3[..., lo:lo + head_dim]               # [bb, S, hd]
            kh = qkv3[..., H + lo:H + lo + head_dim]
            vh = qkv3[..., 2 * H + lo:2 * H + lo + head_dim]
            s = jnp.einsum('bqd,bkd->bqk', qh.astype(mm_dtype),
                           kh.astype(mm_dtype), preferred_element_type=f32)
            s = s - jnp.max(s, axis=-1, keepdims=True)
            p = jnp.exp(s)
            p = p * pl.reciprocal(jnp.sum(p, axis=-1, keepdims=True),
                                  approx=True)             # EUP reciprocal
            oh = jnp.einsum('bqk,bkd->bqd', p.astype(mm_dtype),
                            vh.astype(mm_dtype), preferred_element_type=f32)
            # Partial Wo projection for this head (wo_ref packed per head).
            attn = attn + mm(oh.reshape(rows, head_dim),
                             wo_ref[l * num_heads + h])    # [rows, H]

        # Residual + LayerNorm 1
        y = layer_norm(x2 + attn, g1, be1)

        # FeedForward: fc2(relu(fc1(y)))
        h1 = jnp.maximum(mm(y, w1_ref[l]) + b1, 0.0)
        ff = mm(h1, w2_ref[l]) + b2

        # Residual + LayerNorm 2 -> input of next layer
        x2 = layer_norm(y + ff, g2, be2)

    # Final vocab projection; direct (bb, S, V) store (tiny masked store),
    # no padded lanes and no wrapper-side slice pass over the output.
    out = mm(x2, wfc_ref[...]) + bfc_ref[...]
    o_ref[...] = out.reshape(o_ref.shape).astype(o_ref.dtype)


# ----------------------------------------------------------------------------
# Host-side parameter packing
# ----------------------------------------------------------------------------
def _pack_params(params, num_heads, matmul_dtype):
    layers = params["layers"]
    H = layers[0]["wq"].shape[0]
    F = layers[0]["w1"].shape[1]
    hd = H // num_heads
    scale = 1.0 / np.sqrt(np.float32(hd))
    P = max(3 * H, F)

    def padw(v, width):
        v = v.reshape(-1)
        return jnp.pad(v, (0, width - v.shape[0]))

    wqkv, wo, w1, w2, smalls = [], [], [], [], []
    for lp in layers:
        # Fold the attention scale into Wq/bq (q is only used for scores).
        wqkv.append(jnp.concatenate(
            [lp["wq"] * scale, lp["wk"], lp["wv"]], axis=1))     # [H, 3H]
        # Split Wo per head along its input rows: kernel indexes whole
        # leading-axis tiles (no in-kernel sublane slicing).
        wo.append(lp["wo"].reshape(num_heads, hd, H))            # [nh, hd, H]
        w1.append(lp["w1"])
        w2.append(lp["w2"])
        bqkv = jnp.concatenate(
            [lp["bq"][0] * scale, lp["bk"][0], lp["bv"][0]])     # [3H]
        rows = [padw(bqkv, P), padw(lp["bo"], P), padw(lp["g1"], P),
                padw(lp["be1"], P), padw(lp["b1"], P), padw(lp["b2"], P),
                padw(lp["g2"], P), padw(lp["be2"], P)]
        smalls.append(jnp.stack(rows))                           # [8, P]

    dt = matmul_dtype
    return {
        "wqkv": jnp.stack(wqkv).astype(dt),                      # [L, H, 3H]
        "wo": jnp.concatenate(wo, axis=0).astype(dt),            # [L*nh, hd, H]
        "w1": jnp.stack(w1).astype(dt),                          # [L, H, F]
        "w2": jnp.stack(w2).astype(dt),                          # [L, F, H]
        "smalls": jnp.stack(smalls),                             # [L, 8, P] f32
        "wfc": params["fc_w"].astype(dt),                        # [H, V]
        "bfc": params["fc_b"],                                   # [1, V] f32
    }


def _whole_spec(arr):
    # Untiled full-array weight spec, constant across the batch-block grid
    # (Pallas skips the re-DMA when the block index does not change).
    n = arr.ndim
    return pl.BlockSpec(arr.shape, lambda b, _n=n: (0,) * _n)


# ----------------------------------------------------------------------------
# Forward pass (glue in plain JAX + one fused Pallas kernel)
# ----------------------------------------------------------------------------
def transformer_forward_pallas(tokens, params, pe, num_heads,
                               batch_block=None, matmul_dtype=jnp.bfloat16):
    # Embedding lookup (glue).
    x = params["emb"][tokens]                                # [B, S, H] f32
    B, S, H = x.shape
    # PositionalEncoding exactly as written in the PyTorch code: pe indexed by
    # the *batch* dimension (x.size(0)) and broadcast over seq.  Dropout = id.
    x = x + pe[:B][:, None, :]

    packed = _pack_params(params, num_heads, matmul_dtype)
    L = len(params["layers"])
    F = params["layers"][0]["w1"].shape[1]
    V = params["fc_w"].shape[1]
    nh = num_heads

    if batch_block is None:
        # grid=1 unless each half-batch block still carries >= 256 matmul
        # rows.  Single-TC v5e/v6e: splitting only halves M and adds per-step
        # overhead; v7x megacore only pays off with full MXU tiles per core.
        if B % 2 == 0 and (B // 2) * S >= 256:
            batch_block = B // 2
        else:
            batch_block = B
    assert B % batch_block == 0

    kernel = functools.partial(
        _transformer_kernel, num_layers=L, num_heads=nh,
        head_dim=H // nh, hidden_dim=H, ff_dim=F, mm_dtype=matmul_dtype)

    weights = [packed["wqkv"], packed["wo"], packed["w1"], packed["w2"],
               packed["smalls"], packed["wfc"], packed["bfc"]]

    # VMEM budget from the actual footprint: BlockSpec double-buffers every
    # input (weights included), plus activation/out blocks; keep headroom
    # instead of claiming the full 64 MiB a v7x TensorCore has.
    wt_bytes = sum(int(np.prod(w.shape)) * w.dtype.itemsize for w in weights)
    act_bytes = batch_block * S * (H + V) * 4
    vmem_limit = int(2 * (wt_bytes + act_bytes) * 1.25) + (8 << 20)
    vmem_limit = min(max(vmem_limit, 32 << 20), 96 << 20)

    # Advisory cost estimate for XLA's scheduler around the fused call.
    rows_t = B * S
    flops = (L * (2 * rows_t * H * 3 * H          # QKV proj
                  + 4 * B * S * S * H             # scores + weighted sum
                  + 2 * rows_t * H * H            # Wo
                  + 4 * rows_t * H * F)           # FFN
             + 2 * rows_t * H * V)                # vocab proj
    transc = L * (B * nh * S * S + B * nh * S + 2 * rows_t)
    bytes_acc = int(x.size) * 4 + wt_bytes + B * S * V * 4

    out = pl.pallas_call(
        kernel,
        out_shape=jax.ShapeDtypeStruct((B, S, V), jnp.float32),
        grid_spec=pltpu.PrefetchScalarGridSpec(
            num_scalar_prefetch=0,
            grid=(B // batch_block,),
            in_specs=[pl.BlockSpec((batch_block, S, H), lambda b: (b, 0, 0))]
                     + [_whole_spec(w) for w in weights],
            out_specs=pl.BlockSpec((batch_block, S, V), lambda b: (b, 0, 0)),
        ),
        compiler_params=pltpu.CompilerParams(
            dimension_semantics=("parallel",),
            vmem_limit_bytes=vmem_limit,
        ),
        cost_estimate=pl.CostEstimate(
            flops=int(flops), transcendentals=int(transc),
            bytes_accessed=int(bytes_acc)),
    )(x, *weights)
    return out


# ----------------------------------------------------------------------------
# Parameter construction / positional encoding
# ----------------------------------------------------------------------------
def make_positional_encoding(hidden_dim, max_len=5000):
    pe = np.zeros((max_len, hidden_dim), dtype=np.float32)
    position = np.arange(0, max_len, dtype=np.float32)[:, None]
    div_term = np.exp(np.arange(0, hidden_dim, 2, dtype=np.float32)
                      * (-np.log(10000.0) / hidden_dim))
    pe[:, 0::2] = np.sin(position * div_term)
    pe[:, 1::2] = np.cos(position * div_term)
    return jnp.asarray(pe)                                   # [max_len, H]


def init_params(key, input_dim, hidden_dim, ff_dim, num_layers):
    def nrm(k, shape, scale=0.05):
        return jax.random.normal(k, shape, jnp.float32) * scale

    keys = iter(jax.random.split(key, 8 + num_layers * 20))
    params = {"emb": nrm(next(keys), (input_dim, hidden_dim), 0.1),
              "fc_w": nrm(next(keys), (hidden_dim, input_dim)),
              "fc_b": nrm(next(keys), (1, input_dim)),
              "layers": []}
    for _ in range(num_layers):
        lp = {
            "wq": nrm(next(keys), (hidden_dim, hidden_dim)),
            "bq": nrm(next(keys), (1, hidden_dim)),
            "wk": nrm(next(keys), (hidden_dim, hidden_dim)),
            "bk": nrm(next(keys), (1, hidden_dim)),
            "wv": nrm(next(keys), (hidden_dim, hidden_dim)),
            "bv": nrm(next(keys), (1, hidden_dim)),
            "wo": nrm(next(keys), (hidden_dim, hidden_dim)),
            "bo": nrm(next(keys), (1, hidden_dim)),
            "g1": jnp.ones((1, hidden_dim), jnp.float32),
            "be1": jnp.zeros((1, hidden_dim), jnp.float32),
            "w1": nrm(next(keys), (hidden_dim, ff_dim)),
            "b1": nrm(next(keys), (1, ff_dim)),
            "w2": nrm(next(keys), (ff_dim, hidden_dim)),
            "b2": nrm(next(keys), (1, hidden_dim)),
            "g2": jnp.ones((1, hidden_dim), jnp.float32),
            "be2": jnp.zeros((1, hidden_dim), jnp.float32),
        }
        params["layers"].append(lp)
    return params


# ----------------------------------------------------------------------------
# Pure-JAX reference (defines the PyTorch semantics; for the correctness check)
# ----------------------------------------------------------------------------
def _encoder_layer_ref(x, p, num_heads):
    B, S, H = x.shape
    hd = H // num_heads

    def lin(v, w, b):
        return v @ w + b[0]

    q = lin(x, p["wq"], p["bq"]).reshape(B, S, num_heads, hd).transpose(0, 2, 1, 3)
    k = lin(x, p["wk"], p["bk"]).reshape(B, S, num_heads, hd).transpose(0, 2, 1, 3)
    v = lin(x, p["wv"], p["bv"]).reshape(B, S, num_heads, hd).transpose(0, 2, 1, 3)
    s = jnp.einsum("bhqd,bhkd->bhqk", q, k) / jnp.sqrt(jnp.float32(hd))
    pr = jax.nn.softmax(s, axis=-1)
    a = jnp.einsum("bhqk,bhkd->bhqd", pr, v).transpose(0, 2, 1, 3).reshape(B, S, H)
    a = lin(a, p["wo"], p["bo"])

    def ln(y, g, b):
        mu = jnp.mean(y, axis=-1, keepdims=True)
        var = jnp.mean((y - mu) ** 2, axis=-1, keepdims=True)
        return (y - mu) / jnp.sqrt(var + 1e-5) * g[0] + b[0]

    y = ln(x + a, p["g1"], p["be1"])
    ff = lin(jnp.maximum(lin(y, p["w1"], p["b1"]), 0.0), p["w2"], p["b2"])
    return ln(y + ff, p["g2"], p["be2"])


def transformer_forward_ref(tokens, params, pe, num_heads):
    x = params["emb"][tokens]
    x = x + pe[:x.shape[0]][:, None, :]
    for lp in params["layers"]:
        x = _encoder_layer_ref(x, lp, num_heads)
    return x @ params["fc_w"] + params["fc_b"][0]


# ----------------------------------------------------------------------------
if __name__ == "__main__":
    # Small, module-consistent shapes.
    input_dim = 16     # vocab size
    hidden_dim = 32
    ff_dim = 64
    num_heads = 4
    num_layers = 2
    batch, seq = 2, 8

    key = jax.random.PRNGKey(0)
    k_tok, k_par = jax.random.split(key)
    tokens = jax.random.randint(k_tok, (batch, seq), 0, input_dim, jnp.int32)
    params = init_params(k_par, input_dim, hidden_dim, ff_dim, num_layers)
    pe = make_positional_encoding(hidden_dim)

    ref = jax.block_until_ready(
        transformer_forward_ref(tokens, params, pe, num_heads))

    # Exact-parity path: f32 at the MXU matches the nn.Module's f32 numerics.
    out_f32 = jax.block_until_ready(
        transformer_forward_pallas(tokens, params, pe, num_heads,
                                   matmul_dtype=jnp.float32))
    assert out_f32.shape == (batch, seq, input_dim)
    # Tolerance accounts for the EUP approx-reciprocal softmax denominator.
    np.testing.assert_allclose(np.asarray(out_f32), np.asarray(ref),
                               rtol=2e-3, atol=2e-3)

    # Fast path (v6e/v7x): bf16 operands at every MXU site, f32 accumulation;
    # looser tolerance reflects the bf16 mantissa.
    out_bf16 = jax.block_until_ready(
        transformer_forward_pallas(tokens, params, pe, num_heads))
    assert out_bf16.shape == (batch, seq, input_dim)
    np.testing.assert_allclose(np.asarray(out_bf16), np.asarray(ref),
                               rtol=5e-2, atol=5e-2)
    print("KERNEL_OK")
</pallas_src>

<mosaic_0001>
module attributes {stable_mosaic.version = 11 : i64} {
  func.func @_transformer_kernel(%arg0: i32, %arg1: memref<2x8x32xf32, #tpu.memory_space<vmem>>, %arg2: memref<2x32x96xf32, #tpu.memory_space<vmem>>, %arg3: memref<8x8x32xf32, #tpu.memory_space<vmem>>, %arg4: memref<2x32x64xf32, #tpu.memory_space<vmem>>, %arg5: memref<2x64x32xf32, #tpu.memory_space<vmem>>, %arg6: memref<2x8x96xf32, #tpu.memory_space<vmem>>, %arg7: memref<32x16xf32, #tpu.memory_space<vmem>>, %arg8: memref<1x16xf32, #tpu.memory_space<vmem>>, %arg9: memref<2x8x16xf32, #tpu.memory_space<vmem>>) attributes {dimension_semantics = [#tpu.dimension_semantics<parallel>], iteration_bounds = array<i64: 1>, scalar_prefetch = 0 : i64, scratch_operands = 0 : i64, tpu.core_type = #tpu.core_type<tc>, window_params = [{transform_indices = @transform_0, window_bounds = array<i64: 2, 8, 32>}, {pipeline_mode = #tpu.pipeline_mode<synchronous>, transform_indices = @transform_1, window_bounds = array<i64: 2, 32, 96>}, {pipeline_mode = #tpu.pipeline_mode<synchronous>, transform_indices = @transform_2, window_bounds = array<i64: 8, 8, 32>}, {pipeline_mode = #tpu.pipeline_mode<synchronous>, transform_indices = @transform_3, window_bounds = array<i64: 2, 32, 64>}, {pipeline_mode = #tpu.pipeline_mode<synchronous>, transform_indices = @transform_4, window_bounds = array<i64: 2, 64, 32>}, {pipeline_mode = #tpu.pipeline_mode<synchronous>, transform_indices = @transform_5, window_bounds = array<i64: 2, 8, 96>}, {pipeline_mode = #tpu.pipeline_mode<synchronous>, transform_indices = @transform_6, window_bounds = array<i64: 32, 16>}, {pipeline_mode = #tpu.pipeline_mode<synchronous>, transform_indices = @transform_7, window_bounds = array<i64: 1, 16>}, {transform_indices = @transform_8, window_bounds = array<i64: 2, 8, 16>}]} {
    %c0 = arith.constant 0 : index
    %c0_0 = arith.constant 0 : index
    %c0_1 = arith.constant 0 : index
    %0 = vector.load %arg1[%c0, %c0_0, %c0_1] : memref<2x8x32xf32, #tpu.memory_space<vmem>>, vector<2x8x32xf32>
    %1 = vector.shape_cast %0 : vector<2x8x32xf32> to vector<16x32xf32>
    %c0_2 = arith.constant 0 : index
    %c0_3 = arith.constant 0 : index
    %c0_4 = arith.constant 0 : index
    %2 = vector.load %arg6[%c0_2, %c0_3, %c0_4] : memref<2x8x96xf32, #tpu.memory_space<vmem>>, vector<1x8x96xf32>
    %3 = vector.shape_cast %2 : vector<1x8x96xf32> to vector<8x96xf32>
    %4 = vector.extract_strided_slice %3 {offsets = [0, 0], sizes = [1, 96], strides = [1, 1]} : vector<8x96xf32> to vector<1x96xf32>
    %5 = vector.extract_strided_slice %3 {offsets = [1, 0], sizes = [1, 32], strides = [1, 1]} : vector<8x96xf32> to vector<1x32xf32>
    %6 = vector.extract_strided_slice %3 {offsets = [2, 0], sizes = [1, 32], strides = [1, 1]} : vector<8x96xf32> to vector<1x32xf32>
    %7 = vector.extract_strided_slice %3 {offsets = [3, 0], sizes = [1, 32], strides = [1, 1]} : vector<8x96xf32> to vector<1x32xf32>
    %8 = vector.extract_strided_slice %3 {offsets = [4, 0], sizes = [1, 64], strides = [1, 1]} : vector<8x96xf32> to vector<1x64xf32>
    %9 = vector.extract_strided_slice %3 {offsets = [5, 0], sizes = [1, 32], strides = [1, 1]} : vector<8x96xf32> to vector<1x32xf32>
    %10 = vector.extract_strided_slice %3 {offsets = [6, 0], sizes = [1, 32], strides = [1, 1]} : vector<8x96xf32> to vector<1x32xf32>
    %11 = vector.extract_strided_slice %3 {offsets = [7, 0], sizes = [1, 32], strides = [1, 1]} : vector<8x96xf32> to vector<1x32xf32>
    %c0_5 = arith.constant 0 : index
    %c0_6 = arith.constant 0 : index
    %c0_7 = arith.constant 0 : index
    %12 = vector.load %arg2[%c0_5, %c0_6, %c0_7] : memref<2x32x96xf32, #tpu.memory_space<vmem>>, vector<1x32x96xf32>
    %13 = vector.shape_cast %12 : vector<1x32x96xf32> to vector<32x96xf32>
    %cst = arith.constant dense<0.000000e+00> : vector<16x96xf32>
    %14 = tpu.matmul %1, %13, %cst {dimension_numbers = #tpu.dot_dimension_numbers<[1], [0], [0], [1], [0, 0, 1, 1], [], []>} : vector<16x32xf32>, vector<32x96xf32>, vector<16x96xf32> -> vector<16x96xf32>
    %15 = vector.broadcast %4 : vector<1x96xf32> to vector<16x96xf32>
    %16 = arith.addf %14, %15 : vector<16x96xf32>
    %17 = vector.shape_cast %16 : vector<16x96xf32> to vector<2x8x96xf32>
    %18 = vector.extract_strided_slice %17 {offsets = [0, 0, 0], sizes = [2, 8, 8], strides = [1, 1, 1]} : vector<2x8x96xf32> to vector<2x8x8xf32>
    %19 = vector.extract_strided_slice %17 {offsets = [0, 0, 32], sizes = [2, 8, 8], strides = [1, 1, 1]} : vector<2x8x96xf32> to vector<2x8x8xf32>
    %20 = vector.extract_strided_slice %17 {offsets = [0, 0, 64], sizes = [2, 8, 8], strides = [1, 1, 1]} : vector<2x8x96xf32> to vector<2x8x8xf32>
    "tpu.trace_start"() <{level = 10 : i32, message = "bqd,bkd->bqk"}> : () -> ()
    %cst_8 = arith.constant dense<0.000000e+00> : vector<2x8x8xf32>
    %21 = tpu.matmul %18, %19, %cst_8 {dimension_numbers = #tpu.dot_dimension_numbers<[2], [2], [1], [1], [0, 0, 0, 1, 1, 1], [0], [0]>} : vector<2x8x8xf32>, vector<2x8x8xf32>, vector<2x8x8xf32> -> vector<2x8x8xf32>
    "tpu.trace_stop"() : () -> ()
    %cst_9 = arith.constant dense<0xFF800000> : vector<2x8xf32>
    %22 = vector.multi_reduction <maximumf>, %21, %cst_9 [2] : vector<2x8x8xf32> to vector<2x8xf32>
    %23 = vector.shape_cast %22 : vector<2x8xf32> to vector<2x8x1xf32>
    %24 = vector.broadcast %23 : vector<2x8x1xf32> to vector<2x8x8xf32>
    %25 = arith.subf %21, %24 : vector<2x8x8xf32>
    %26 = math.exp %25 : vector<2x8x8xf32>
    %cst_10 = arith.constant dense<0.000000e+00> : vector<2x8xf32>
    %27 = vector.multi_reduction <add>, %26, %cst_10 [2] : vector<2x8x8xf32> to vector<2x8xf32>
    %28 = vector.shape_cast %27 : vector<2x8xf32> to vector<2x8x1xf32>
    %29 = tpu.reciprocal %28 {approx = true} : vector<2x8x1xf32> -> vector<2x8x1xf32>
    %30 = vector.broadcast %29 : vector<2x8x1xf32> to vector<2x8x8xf32>
    %31 = arith.mulf %26, %30 : vector<2x8x8xf32>
    "tpu.trace_start"() <{level = 10 : i32, message = "bqk,bkd->bqd"}> : () -> ()
    %cst_11 = arith.constant dense<0.000000e+00> : vector<2x8x8xf32>
    %32 = tpu.matmul %31, %20, %cst_11 {dimension_numbers = #tpu.dot_dimension_numbers<[2], [1], [1], [2], [0, 0, 0, 1, 1, 2], [0], [0]>} : vector<2x8x8xf32>, vector<2x8x8xf32>, vector<2x8x8xf32> -> vector<2x8x8xf32>
    "tpu.trace_stop"() : () -> ()
    %33 = vector.shape_cast %32 : vector<2x8x8xf32> to vector<16x8xf32>
    %c0_12 = arith.constant 0 : index
    %c0_13 = arith.constant 0 : index
    %c0_14 = arith.constant 0 : index
    %34 = vector.load %arg3[%c0_12, %c0_13, %c0_14] : memref<8x8x32xf32, #tpu.memory_space<vmem>>, vector<1x8x32xf32>
    %35 = vector.shape_cast %34 : vector<1x8x32xf32> to vector<8x32xf32>
    %cst_15 = arith.constant dense<0.000000e+00> : vector<16x32xf32>
    %36 = tpu.matmul %33, %35, %cst_15 {dimension_numbers = #tpu.dot_dimension_numbers<[1], [0], [0], [1], [0, 0, 1, 1], [], []>} : vector<16x8xf32>, vector<8x32xf32>, vector<16x32xf32> -> vector<16x32xf32>
    %37 = vector.broadcast %5 : vector<1x32xf32> to vector<16x32xf32>
    %38 = arith.addf %37, %36 : vector<16x32xf32>
    %39 = vector.extract_strided_slice %17 {offsets = [0, 0, 8], sizes = [2, 8, 8], strides = [1, 1, 1]} : vector<2x8x96xf32> to vector<2x8x8xf32>
    %40 = vector.extract_strided_slice %17 {offsets = [0, 0, 40], sizes = [2, 8, 8], strides = [1, 1, 1]} : vector<2x8x96xf32> to vector<2x8x8xf32>
    %41 = vector.extract_strided_slice %17 {offsets = [0, 0, 72], sizes = [2, 8, 8], strides = [1, 1, 1]} : vector<2x8x96xf32> to vector<2x8x8xf32>
    "tpu.trace_start"() <{level = 10 : i32, message = "bqd,bkd->bqk"}> : () -> ()
    %cst_16 = arith.constant dense<0.000000e+00> : vector<2x8x8xf32>
    %42 = tpu.matmul %39, %40, %cst_16 {dimension_numbers = #tpu.dot_dimension_numbers<[2], [2], [1], [1], [0, 0, 0, 1, 1, 1], [0], [0]>} : vector<2x8x8xf32>, vector<2x8x8xf32>, vector<2x8x8xf32> -> vector<2x8x8xf32>
    "tpu.trace_stop"() : () -> ()
    %cst_17 = arith.constant dense<0xFF800000> : vector<2x8xf32>
    %43 = vector.multi_reduction <maximumf>, %42, %cst_17 [2] : vector<2x8x8xf32> to vector<2x8xf32>
    %44 = vector.shape_cast %43 : vector<2x8xf32> to vector<2x8x1xf32>
    %45 = vector.broadcast %44 : vector<2x8x1xf32> to vector<2x8x8xf32>
    %46 = arith.subf %42, %45 : vector<2x8x8xf32>
    %47 = math.exp %46 : vector<2x8x8xf32>
    %cst_18 = arith.constant dense<0.000000e+00> : vector<2x8xf32>
    %48 = vector.multi_reduction <add>, %47, %cst_18 [2] : vector<2x8x8xf32> to vector<2x8xf32>
    %49 = vector.shape_cast %48 : vector<2x8xf32> to vector<2x8x1xf32>
    %50 = tpu.reciprocal %49 {approx = true} : vector<2x8x1xf32> -> vector<2x8x1xf32>
    %51 = vector.broadcast %50 : vector<2x8x1xf32> to vector<2x8x8xf32>
    %52 = arith.mulf %47, %51 : vector<2x8x8xf32>
    "tpu.trace_start"() <{level = 10 : i32, message = "bqk,bkd->bqd"}> : () -> ()
    %cst_19 = arith.constant dense<0.000000e+00> : vector<2x8x8xf32>
    %53 = tpu.matmul %52, %41, %cst_19 {dimension_numbers = #tpu.dot_dimension_numbers<[2], [1], [1], [2], [0, 0, 0, 1, 1, 2], [0], [0]>} : vector<2x8x8xf32>, vector<2x8x8xf32>, vector<2x8x8xf32> -> vector<2x8x8xf32>
    "tpu.trace_stop"() : () -> ()
    %54 = vector.shape_cast %53 : vector<2x8x8xf32> to vector<16x8xf32>
    %c1 = arith.constant 1 : index
    %c0_20 = arith.constant 0 : index
    %c0_21 = arith.constant 0 : index
    %55 = vector.load %arg3[%c1, %c0_20, %c0_21] : memref<8x8x32xf32, #tpu.memory_space<vmem>>, vector<1x8x32xf32>
    %56 = vector.shape_cast %55 : vector<1x8x32xf32> to vector<8x32xf32>
    %cst_22 = arith.constant dense<0.000000e+00> : vector<16x32xf32>
    %57 = tpu.matmul %54, %56, %cst_22 {dimension_numbers = #tpu.dot_dimension_numbers<[1], [0], [0], [1], [0, 0, 1, 1], [], []>} : vector<16x8xf32>, vector<8x32xf32>, vector<16x32xf32> -> vector<16x32xf32>
    %58 = arith.addf %38, %57 : vector<16x32xf32>
    %59 = vector.extract_strided_slice %17 {offsets = [0, 0, 16], sizes = [2, 8, 8], strides = [1, 1, 1]} : vector<2x8x96xf32> to vector<2x8x8xf32>
    %60 = vector.extract_strided_slice %17 {offsets = [0, 0, 48], sizes = [2, 8, 8], strides = [1, 1, 1]} : vector<2x8x96xf32> to vector<2x8x8xf32>
    %61 = vector.extract_strided_slice %17 {offsets = [0, 0, 80], sizes = [2, 8, 8], strides = [1, 1, 1]} : vector<2x8x96xf32> to vector<2x8x8xf32>
    "tpu.trace_start"() <{level = 10 : i32, message = "bqd,bkd->bqk"}> : () -> ()
    %cst_23 = arith.constant dense<0.000000e+00> : vector<2x8x8xf32>
    %62 = tpu.matmul %59, %60, %cst_23 {dimension_numbers = #tpu.dot_dimension_numbers<[2], [2], [1], [1], [0, 0, 0, 1, 1, 1], [0], [0]>} : vector<2x8x8xf32>, vector<2x8x8xf32>, vector<2x8x8xf32> -> vector<2x8x8xf32>
    "tpu.trace_stop"() : () -> ()
    %cst_24 = arith.constant dense<0xFF800000> : vector<2x8xf32>
    %63 = vector.multi_reduction <maximumf>, %62, %cst_24 [2] : vector<2x8x8xf32> to vector<2x8xf32>
    %64 = vector.shape_cast %63 : vector<2x8xf32> to vector<2x8x1xf32>
    %65 = vector.broadcast %64 : vector<2x8x1xf32> to vector<2x8x8xf32>
    %66 = arith.subf %62, %65 : vector<2x8x8xf32>
    %67 = math.exp %66 : vector<2x8x8xf32>
    %cst_25 = arith.constant dense<0.000000e+00> : vector<2x8xf32>
    %68 = vector.multi_reduction <add>, %67, %cst_25 [2] : vector<2x8x8xf32> to vector<2x8xf32>
    %69 = vector.shape_cast %68 : vector<2x8xf32> to vector<2x8x1xf32>
    %70 = tpu.reciprocal %69 {approx = true} : vector<2x8x1xf32> -> vector<2x8x1xf32>
    %71 = vector.broadcast %70 : vector<2x8x1xf32> to vector<2x8x8xf32>
    %72 = arith.mulf %67, %71 : vector<2x8x8xf32>
    "tpu.trace_start"() <{level = 10 : i32, message = "bqk,bkd->bqd"}> : () -> ()
    %cst_26 = arith.constant dense<0.000000e+00> : vector<2x8x8xf32>
    %73 = tpu.matmul %72, %61, %cst_26 {dimension_numbers = #tpu.dot_dimension_numbers<[2], [1], [1], [2], [0, 0, 0, 1, 1, 2], [0], [0]>} : vector<2x8x8xf32>, vector<2x8x8xf32>, vector<2x8x8xf32> -> vector<2x8x8xf32>
    "tpu.trace_stop"() : () -> ()
    %74 = vector.shape_cast %73 : vector<2x8x8xf32> to vector<16x8xf32>
    %c2 = arith.constant 2 : index
    %c0_27 = arith.constant 0 : index
    %c0_28 = arith.constant 0 : index
    %75 = vector.load %arg3[%c2, %c0_27, %c0_28] : memref<8x8x32xf32, #tpu.memory_space<vmem>>, vector<1x8x32xf32>
    %76 = vector.shape_cast %75 : vector<1x8x32xf32> to vector<8x32xf32>
    %cst_29 = arith.constant dense<0.000000e+00> : vector<16x32xf32>
    %77 = tpu.matmul %74, %76, %cst_29 {dimension_numbers = #tpu.dot_dimension_numbers<[1], [0], [0], [1], [0, 0, 1, 1], [], []>} : vector<16x8xf32>, vector<8x32xf32>, vector<16x32xf32> -> vector<16x32xf32>
    %78 = arith.addf %58, %77 : vector<16x32xf32>
    %79 = vector.extract_strided_slice %17 {offsets = [0, 0, 24], sizes = [2, 8, 8], strides = [1, 1, 1]} : vector<2x8x96xf32> to vector<2x8x8xf32>
    %80 = vector.extract_strided_slice %17 {offsets = [0, 0, 56], sizes = [2, 8, 8], strides = [1, 1, 1]} : vector<2x8x96xf32> to vector<2x8x8xf32>
    %81 = vector.extract_strided_slice %17 {offsets = [0, 0, 88], sizes = [2, 8, 8], strides = [1, 1, 1]} : vector<2x8x96xf32> to vector<2x8x8xf32>
    "tpu.trace_start"() <{level = 10 : i32, message = "bqd,bkd->bqk"}> : () -> ()
    %cst_30 = arith.constant dense<0.000000e+00> : vector<2x8x8xf32>
    %82 = tpu.matmul %79, %80, %cst_30 {dimension_numbers = #tpu.dot_dimension_numbers<[2], [2], [1], [1], [0, 0, 0, 1, 1, 1], [0], [0]>} : vector<2x8x8xf32>, vector<2x8x8xf32>, vector<2x8x8xf32> -> vector<2x8x8xf32>
    "tpu.trace_stop"() : () -> ()
    %cst_31 = arith.constant dense<0xFF800000> : vector<2x8xf32>
    %83 = vector.multi_reduction <maximumf>, %82, %cst_31 [2] : vector<2x8x8xf32> to vector<2x8xf32>
    %84 = vector.shape_cast %83 : vector<2x8xf32> to vector<2x8x1xf32>
    %85 = vector.broadcast %84 : vector<2x8x1xf32> to vector<2x8x8xf32>
    %86 = arith.subf %82, %85 : vector<2x8x8xf32>
    %87 = math.exp %86 : vector<2x8x8xf32>
    %cst_32 = arith.constant dense<0.000000e+00> : vector<2x8xf32>
    %88 = vector.multi_reduction <add>, %87, %cst_32 [2] : vector<2x8x8xf32> to vector<2x8xf32>
    %89 = vector.shape_cast %88 : vector<2x8xf32> to vector<2x8x1xf32>
    %90 = tpu.reciprocal %89 {approx = true} : vector<2x8x1xf32> -> vector<2x8x1xf32>
    %91 = vector.broadcast %90 : vector<2x8x1xf32> to vector<2x8x8xf32>
    %92 = arith.mulf %87, %91 : vector<2x8x8xf32>
    "tpu.trace_start"() <{level = 10 : i32, message = "bqk,bkd->bqd"}> : () -> ()
    %cst_33 = arith.constant dense<0.000000e+00> : vector<2x8x8xf32>
    %93 = tpu.matmul %92, %81, %cst_33 {dimension_numbers = #tpu.dot_dimension_numbers<[2], [1], [1], [2], [0, 0, 0, 1, 1, 2], [0], [0]>} : vector<2x8x8xf32>, vector<2x8x8xf32>, vector<2x8x8xf32> -> vector<2x8x8xf32>
    "tpu.trace_stop"() : () -> ()
    %94 = vector.shape_cast %93 : vector<2x8x8xf32> to vector<16x8xf32>
    %c3 = arith.constant 3 : index
    %c0_34 = arith.constant 0 : index
    %c0_35 = arith.constant 0 : index
    %95 = vector.load %arg3[%c3, %c0_34, %c0_35] : memref<8x8x32xf32, #tpu.memory_space<vmem>>, vector<1x8x32xf32>
    %96 = vector.shape_cast %95 : vector<1x8x32xf32> to vector<8x32xf32>
    %cst_36 = arith.constant dense<0.000000e+00> : vector<16x32xf32>
    %97 = tpu.matmul %94, %96, %cst_36 {dimension_numbers = #tpu.dot_dimension_numbers<[1], [0], [0], [1], [0, 0, 1, 1], [], []>} : vector<16x8xf32>, vector<8x32xf32>, vector<16x32xf32> -> vector<16x32xf32>
    %98 = arith.addf %78, %97 : vector<16x32xf32>
    %99 = arith.addf %1, %98 : vector<16x32xf32>
    %cst_37 = arith.constant dense<0.000000e+00> : vector<16xf32>
    %100 = vector.multi_reduction <add>, %99, %cst_37 [1] : vector<16x32xf32> to vector<16xf32>
    %101 = vector.shape_cast %100 : vector<16xf32> to vector<16x1xf32>
    %cst_38 = arith.constant 3.200000e+01 : f32
    %102 = vector.broadcast %cst_38 : f32 to vector<16x1xf32>
    %103 = arith.divf %101, %102 : vector<16x1xf32>
    %104 = arith.mulf %99, %99 : vector<16x32xf32>
    %cst_39 = arith.constant dense<0.000000e+00> : vector<16xf32>
    %105 = vector.multi_reduction <add>, %104, %cst_39 [1] : vector<16x32xf32> to vector<16xf32>
    %106 = vector.shape_cast %105 : vector<16xf32> to vector<16x1xf32>
    %cst_40 = arith.constant 3.200000e+01 : f32
    %107 = vector.broadcast %cst_40 : f32 to vector<16x1xf32>
    %108 = arith.divf %106, %107 : vector<16x1xf32>
    %109 = arith.mulf %103, %103 : vector<16x1xf32>
    %110 = arith.subf %108, %109 : vector<16x1xf32>
    %111 = vector.broadcast %103 : vector<16x1xf32> to vector<16x32xf32>
    %112 = arith.subf %99, %111 : vector<16x32xf32>
    %cst_41 = arith.constant 9.99999974E-6 : f32
    %113 = vector.broadcast %cst_41 : f32 to vector<16x1xf32>
    %114 = arith.addf %110, %113 : vector<16x1xf32>
    %115 = math.rsqrt %114 : vector<16x1xf32>
    %116 = vector.broadcast %115 : vector<16x1xf32> to vector<16x32xf32>
    %117 = arith.mulf %112, %116 : vector<16x32xf32>
    %118 = vector.broadcast %6 : vector<1x32xf32> to vector<16x32xf32>
    %119 = arith.mulf %117, %118 : vector<16x32xf32>
    %120 = vector.broadcast %7 : vector<1x32xf32> to vector<16x32xf32>
    %121 = arith.addf %119, %120 : vector<16x32xf32>
    %c0_42 = arith.constant 0 : index
    %c0_43 = arith.constant 0 : index
    %c0_44 = arith.constant 0 : index
    %122 = vector.load %arg4[%c0_42, %c0_43, %c0_44] : memref<2x32x64xf32, #tpu.memory_space<vmem>>, vector<1x32x64xf32>
    %123 = vector.shape_cast %122 : vector<1x32x64xf32> to vector<32x64xf32>
    %cst_45 = arith.constant dense<0.000000e+00> : vector<16x64xf32>
    %124 = tpu.matmul %121, %123, %cst_45 {dimension_numbers = #tpu.dot_dimension_numbers<[1], [0], [0], [1], [0, 0, 1, 1], [], []>} : vector<16x32xf32>, vector<32x64xf32>, vector<16x64xf32> -> vector<16x64xf32>
    %125 = vector.broadcast %8 : vector<1x64xf32> to vector<16x64xf32>
    %126 = arith.addf %124, %125 : vector<16x64xf32>
    %cst_46 = arith.constant 0.000000e+00 : f32
    %127 = vector.broadcast %cst_46 : f32 to vector<16x64xf32>
    %128 = arith.maximumf %126, %127 : vector<16x64xf32>
    %c0_47 = arith.constant 0 : index
    %c0_48 = arith.constant 0 : index
    %c0_49 = arith.constant 0 : index
    %129 = vector.load %arg5[%c0_47, %c0_48, %c0_49] : memref<2x64x32xf32, #tpu.memory_space<vmem>>, vector<1x64x32xf32>
    %130 = vector.shape_cast %129 : vector<1x64x32xf32> to vector<64x32xf32>
    %cst_50 = arith.constant dense<0.000000e+00> : vector<16x32xf32>
    %131 = tpu.matmul %128, %130, %cst_50 {dimension_numbers = #tpu.dot_dimension_numbers<[1], [0], [0], [1], [0, 0, 1, 1], [], []>} : vector<16x64xf32>, vector<64x32xf32>, vector<16x32xf32> -> vector<16x32xf32>
    %132 = vector.broadcast %9 : vector<1x32xf32> to vector<16x32xf32>
    %133 = arith.addf %131, %132 : vector<16x32xf32>
    %134 = arith.addf %121, %133 : vector<16x32xf32>
    %cst_51 = arith.constant dense<0.000000e+00> : vector<16xf32>
    %135 = vector.multi_reduction <add>, %134, %cst_51 [1] : vector<16x32xf32> to vector<16xf32>
    %136 = vector.shape_cast %135 : vector<16xf32> to vector<16x1xf32>
    %cst_52 = arith.constant 3.200000e+01 : f32
    %137 = vector.broadcast %cst_52 : f32 to vector<16x1xf32>
    %138 = arith.divf %136, %137 : vector<16x1xf32>
    %139 = arith.mulf %134, %134 : vector<16x32xf32>
    %cst_53 = arith.constant dense<0.000000e+00> : vector<16xf32>
    %140 = vector.multi_reduction <add>, %139, %cst_53 [1] : vector<16x32xf32> to vector<16xf32>
    %141 = vector.shape_cast %140 : vector<16xf32> to vector<16x1xf32>
    %cst_54 = arith.constant 3.200000e+01 : f32
    %142 = vector.broadcast %cst_54 : f32 to vector<16x1xf32>
    %143 = arith.divf %141, %142 : vector<16x1xf32>
    %144 = arith.mulf %138, %138 : vector<16x1xf32>
    %145 = arith.subf %143, %144 : vector<16x1xf32>
    %146 = vector.broadcast %138 : vector<16x1xf32> to vector<16x32xf32>
    %147 = arith.subf %134, %146 : vector<16x32xf32>
    %cst_55 = arith.constant 9.99999974E-6 : f32
    %148 = vector.broadcast %cst_55 : f32 to vector<16x1xf32>
    %149 = arith.addf %145, %148 : vector<16x1xf32>
    %150 = math.rsqrt %149 : vector<16x1xf32>
    %151 = vector.broadcast %150 : vector<16x1xf32> to vector<16x32xf32>
    %152 = arith.mulf %147, %151 : vector<16x32xf32>
    %153 = vector.broadcast %10 : vector<1x32xf32> to vector<16x32xf32>
    %154 = arith.mulf %152, %153 : vector<16x32xf32>
    %155 = vector.broadcast %11 : vector<1x32xf32> to vector<16x32xf32>
    %156 = arith.addf %154, %155 : vector<16x32xf32>
    %c1_56 = arith.constant 1 : index
    %c0_57 = arith.constant 0 : index
    %c0_58 = arith.constant 0 : index
    %157 = vector.load %arg6[%c1_56, %c0_57, %c0_58] : memref<2x8x96xf32, #tpu.memory_space<vmem>>, vector<1x8x96xf32>
    %158 = vector.shape_cast %157 : vector<1x8x96xf32> to vector<8x96xf32>
    %159 = vector.extract_strided_slice %158 {offsets = [0, 0], sizes = [1, 96], strides = [1, 1]} : vector<8x96xf32> to vector<1x96xf32>
    %160 = vector.extract_strided_slice %158 {offsets = [1, 0], sizes = [1, 32], strides = [1, 1]} : vector<8x96xf32> to vector<1x32xf32>
    %161 = vector.extract_strided_slice %158 {offsets = [2, 0], sizes = [1, 32], strides = [1, 1]} : vector<8x96xf32> to vector<1x32xf32>
    %162 = vector.extract_strided_slice %158 {offsets = [3, 0], sizes = [1, 32], strides = [1, 1]} : vector<8x96xf32> to vector<1x32xf32>
    %163 = vector.extract_strided_slice %158 {offsets = [4, 0], sizes = [1, 64], strides = [1, 1]} : vector<8x96xf32> to vector<1x64xf32>
    %164 = vector.extract_strided_slice %158 {offsets = [5, 0], sizes = [1, 32], strides = [1, 1]} : vector<8x96xf32> to vector<1x32xf32>
    %165 = vector.extract_strided_slice %158 {offsets = [6, 0], sizes = [1, 32], strides = [1, 1]} : vector<8x96xf32> to vector<1x32xf32>
    %166 = vector.extract_strided_slice %158 {offsets = [7, 0], sizes = [1, 32], strides = [1, 1]} : vector<8x96xf32> to vector<1x32xf32>
    %c1_59 = arith.constant 1 : index
    %c0_60 = arith.constant 0 : index
    %c0_61 = arith.constant 0 : index
    %167 = vector.load %arg2[%c1_59, %c0_60, %c0_61] : memref<2x32x96xf32, #tpu.memory_space<vmem>>, vector<1x32x96xf32>
    %168 = vector.shape_cast %167 : vector<1x32x96xf32> to vector<32x96xf32>
    %cst_62 = arith.constant dense<0.000000e+00> : vector<16x96xf32>
    %169 = tpu.matmul %156, %168, %cst_62 {dimension_numbers = #tpu.dot_dimension_numbers<[1], [0], [0], [1], [0, 0, 1, 1], [], []>} : vector<16x32xf32>, vector<32x96xf32>, vector<16x96xf32> -> vector<16x96xf32>
    %170 = vector.broadcast %159 : vector<1x96xf32> to vector<16x96xf32>
    %171 = arith.addf %169, %170 : vector<16x96xf32>
    %172 = vector.shape_cast %171 : vector<16x96xf32> to vector<2x8x96xf32>
    %173 = vector.extract_strided_slice %172 {offsets = [0, 0, 0], sizes = [2, 8, 8], strides = [1, 1, 1]} : vector<2x8x96xf32> to vector<2x8x8xf32>
    %174 = vector.extract_strided_slice %172 {offsets = [0, 0, 32], sizes = [2, 8, 8], strides = [1, 1, 1]} : vector<2x8x96xf32> to vector<2x8x8xf32>
    %175 = vector.extract_strided_slice %172 {offsets = [0, 0, 64], sizes = [2, 8, 8], strides = [1, 1, 1]} : vector<2x8x96xf32> to vector<2x8x8xf32>
    "tpu.trace_start"() <{level = 10 : i32, message = "bqd,bkd->bqk"}> : () -> ()
    %cst_63 = arith.constant dense<0.000000e+00> : vector<2x8x8xf32>
    %176 = tpu.matmul %173, %174, %cst_63 {dimension_numbers = #tpu.dot_dimension_numbers<[2], [2], [1], [1], [0, 0, 0, 1, 1, 1], [0], [0]>} : vector<2x8x8xf32>, vector<2x8x8xf32>, vector<2x8x8xf32> -> vector<2x8x8xf32>
    "tpu.trace_stop"() : () -> ()
    %cst_64 = arith.constant dense<0xFF800000> : vector<2x8xf32>
    %177 = vector.multi_reduction <maximumf>, %176, %cst_64 [2] : vector<2x8x8xf32> to vector<2x8xf32>
    %178 = vector.shape_cast %177 : vector<2x8xf32> to vector<2x8x1xf32>
    %179 = vector.broadcast %178 : vector<2x8x1xf32> to vector<2x8x8xf32>
    %180 = arith.subf %176, %179 : vector<2x8x8xf32>
    %181 = math.exp %180 : vector<2x8x8xf32>
    %cst_65 = arith.constant dense<0.000000e+00> : vector<2x8xf32>
    %182 = vector.multi_reduction <add>, %181, %cst_65 [2] : vector<2x8x8xf32> to vector<2x8xf32>
    %183 = vector.shape_cast %182 : vector<2x8xf32> to vector<2x8x1xf32>
    %184 = tpu.reciprocal %183 {approx = true} : vector<2x8x1xf32> -> vector<2x8x1xf32>
    %185 = vector.broadcast %184 : vector<2x8x1xf32> to vector<2x8x8xf32>
    %186 = arith.mulf %181, %185 : vector<2x8x8xf32>
    "tpu.trace_start"() <{level = 10 : i32, message = "bqk,bkd->bqd"}> : () -> ()
    %cst_66 = arith.constant dense<0.000000e+00> : vector<2x8x8xf32>
    %187 = tpu.matmul %186, %175, %cst_66 {dimension_numbers = #tpu.dot_dimension_numbers<[2], [1], [1], [2], [0, 0, 0, 1, 1, 2], [0], [0]>} : vector<2x8x8xf32>, vector<2x8x8xf32>, vector<2x8x8xf32> -> vector<2x8x8xf32>
    "tpu.trace_stop"() : () -> ()
    %188 = vector.shape_cast %187 : vector<2x8x8xf32> to vector<16x8xf32>
    %c4 = arith.constant 4 : index
    %c0_67 = arith.constant 0 : index
    %c0_68 = arith.constant 0 : index
    %189 = vector.load %arg3[%c4, %c0_67, %c0_68] : memref<8x8x32xf32, #tpu.memory_space<vmem>>, vector<1x8x32xf32>
    %190 = vector.shape_cast %189 : vector<1x8x32xf32> to vector<8x32xf32>
    %cst_69 = arith.constant dense<0.000000e+00> : vector<16x32xf32>
    %191 = tpu.matmul %188, %190, %cst_69 {dimension_numbers = #tpu.dot_dimension_numbers<[1], [0], [0], [1], [0, 0, 1, 1], [], []>} : vector<16x8xf32>, vector<8x32xf32>, vector<16x32xf32> -> vector<16x32xf32>
    %192 = vector.broadcast %160 : vector<1x32xf32> to vector<16x32xf32>
    %193 = arith.addf %192, %191 : vector<16x32xf32>
    %194 = vector.extract_strided_slice %172 {offsets = [0, 0, 8], sizes = [2, 8, 8], strides = [1, 1, 1]} : vector<2x8x96xf32> to vector<2x8x8xf32>
    %195 = vector.extract_strided_slice %172 {offsets = [0, 0, 40], sizes = [2, 8, 8], strides = [1, 1, 1]} : vector<2x8x96xf32> to vector<2x8x8xf32>
    %196 = vector.extract_strided_slice %172 {offsets = [0, 0, 72], sizes = [2, 8, 8], strides = [1, 1, 1]} : vector<2x8x96xf32> to vector<2x8x8xf32>
    "tpu.trace_start"() <{level = 10 : i32, message = "bqd,bkd->bqk"}> : () -> ()
    %cst_70 = arith.constant dense<0.000000e+00> : vector<2x8x8xf32>
    %197 = tpu.matmul %194, %195, %cst_70 {dimension_numbers = #tpu.dot_dimension_numbers<[2], [2], [1], [1], [0, 0, 0, 1, 1, 1], [0], [0]>} : vector<2x8x8xf32>, vector<2x8x8xf32>, vector<2x8x8xf32> -> vector<2x8x8xf32>
    "tpu.trace_stop"() : () -> ()
    %cst_71 = arith.constant dense<0xFF800000> : vector<2x8xf32>
    %198 = vector.multi_reduction <maximumf>, %197, %cst_71 [2] : vector<2x8x8xf32> to vector<2x8xf32>
    %199 = vector.shape_cast %198 : vector<2x8xf32> to vector<2x8x1xf32>
    %200 = vector.broadcast %199 : vector<2x8x1xf32> to vector<2x8x8xf32>
    %201 = arith.subf %197, %200 : vector<2x8x8xf32>
    %202 = math.exp %201 : vector<2x8x8xf32>
    %cst_72 = arith.constant dense<0.000000e+00> : vector<2x8xf32>
    %203 = vector.multi_reduction <add>, %202, %cst_72 [2] : vector<2x8x8xf32> to vector<2x8xf32>
    %204 = vector.shape_cast %203 : vector<2x8xf32> to vector<2x8x1xf32>
    %205 = tpu.reciprocal %204 {approx = true} : vector<2x8x1xf32> -> vector<2x8x1xf32>
    %206 = vector.broadcast %205 : vector<2x8x1xf32> to vector<2x8x8xf32>
    %207 = arith.mulf %202, %206 : vector<2x8x8xf32>
    "tpu.trace_start"() <{level = 10 : i32, message = "bqk,bkd->bqd"}> : () -> ()
    %cst_73 = arith.constant dense<0.000000e+00> : vector<2x8x8xf32>
    %208 = tpu.matmul %207, %196, %cst_73 {dimension_numbers = #tpu.dot_dimension_numbers<[2], [1], [1], [2], [0, 0, 0, 1, 1, 2], [0], [0]>} : vector<2x8x8xf32>, vector<2x8x8xf32>, vector<2x8x8xf32> -> vector<2x8x8xf32>
    "tpu.trace_stop"() : () -> ()
    %209 = vector.shape_cast %208 : vector<2x8x8xf32> to vector<16x8xf32>
    %c5 = arith.constant 5 : index
    %c0_74 = arith.constant 0 : index
    %c0_75 = arith.constant 0 : index
    %210 = vector.load %arg3[%c5, %c0_74, %c0_75] : memref<8x8x32xf32, #tpu.memory_space<vmem>>, vector<1x8x32xf32>
    %211 = vector.shape_cast %210 : vector<1x8x32xf32> to vector<8x32xf32>
    %cst_76 = arith.constant dense<0.000000e+00> : vector<16x32xf32>
    %212 = tpu.matmul %209, %211, %cst_76 {dimension_numbers = #tpu.dot_dimension_numbers<[1], [0], [0], [1], [0, 0, 1, 1], [], []>} : vector<16x8xf32>, vector<8x32xf32>, vector<16x32xf32> -> vector<16x32xf32>
    %213 = arith.addf %193, %212 : vector<16x32xf32>
    %214 = vector.extract_strided_slice %172 {offsets = [0, 0, 16], sizes = [2, 8, 8], strides = [1, 1, 1]} : vector<2x8x96xf32> to vector<2x8x8xf32>
    %215 = vector.extract_strided_slice %172 {offsets = [0, 0, 48], sizes = [2, 8, 8], strides = [1, 1, 1]} : vector<2x8x96xf32> to vector<2x8x8xf32>
    %216 = vector.extract_strided_slice %172 {offsets = [0, 0, 80], sizes = [2, 8, 8], strides = [1, 1, 1]} : vector<2x8x96xf32> to vector<2x8x8xf32>
    "tpu.trace_start"() <{level = 10 : i32, message = "bqd,bkd->bqk"}> : () -> ()
    %cst_77 = arith.constant dense<0.000000e+00> : vector<2x8x8xf32>
    %217 = tpu.matmul %214, %215, %cst_77 {dimension_numbers = #tpu.dot_dimension_numbers<[2], [2], [1], [1], [0, 0, 0, 1, 1, 1], [0], [0]>} : vector<2x8x8xf32>, vector<2x8x8xf32>, vector<2x8x8xf32> -> vector<2x8x8xf32>
    "tpu.trace_stop"() : () -> ()
    %cst_78 = arith.constant dense<0xFF800000> : vector<2x8xf32>
    %218 = vector.multi_reduction <maximumf>, %217, %cst_78 [2] : vector<2x8x8xf32> to vector<2x8xf32>
    %219 = vector.shape_cast %218 : vector<2x8xf32> to vector<2x8x1xf32>
    %220 = vector.broadcast %219 : vector<2x8x1xf32> to vector<2x8x8xf32>
    %221 = arith.subf %217, %220 : vector<2x8x8xf32>
    %222 = math.exp %221 : vector<2x8x8xf32>
    %cst_79 = arith.constant dense<0.000000e+00> : vector<2x8xf32>
    %223 = vector.multi_reduction <add>, %222, %cst_79 [2] : vector<2x8x8xf32> to vector<2x8xf32>
    %224 = vector.shape_cast %223 : vector<2x8xf32> to vector<2x8x1xf32>
    %225 = tpu.reciprocal %224 {approx = true} : vector<2x8x1xf32> -> vector<2x8x1xf32>
    %226 = vector.broadcast %225 : vector<2x8x1xf32> to vector<2x8x8xf32>
    %227 = arith.mulf %222, %226 : vector<2x8x8xf32>
    "tpu.trace_start"() <{level = 10 : i32, message = "bqk,bkd->bqd"}> : () -> ()
    %cst_80 = arith.constant dense<0.000000e+00> : vector<2x8x8xf32>
    %228 = tpu.matmul %227, %216, %cst_80 {dimension_numbers = #tpu.dot_dimension_numbers<[2], [1], [1], [2], [0, 0, 0, 1, 1, 2], [0], [0]>} : vector<2x8x8xf32>, vector<2x8x8xf32>, vector<2x8x8xf32> -> vector<2x8x8xf32>
    "tpu.trace_stop"() : () -> ()
    %229 = vector.shape_cast %228 : vector<2x8x8xf32> to vector<16x8xf32>
    %c6 = arith.constant 6 : index
    %c0_81 = arith.constant 0 : index
    %c0_82 = arith.constant 0 : index
    %230 = vector.load %arg3[%c6, %c0_81, %c0_82] : memref<8x8x32xf32, #tpu.memory_space<vmem>>, vector<1x8x32xf32>
    %231 = vector.shape_cast %230 : vector<1x8x32xf32> to vector<8x32xf32>
    %cst_83 = arith.constant dense<0.000000e+00> : vector<16x32xf32>
    %232 = tpu.matmul %229, %231, %cst_83 {dimension_numbers = #tpu.dot_dimension_numbers<[1], [0], [0], [1], [0, 0, 1, 1], [], []>} : vector<16x8xf32>, vector<8x32xf32>, vector<16x32xf32> -> vector<16x32xf32>
    %233 = arith.addf %213, %232 : vector<16x32xf32>
    %234 = vector.extract_strided_slice %172 {offsets = [0, 0, 24], sizes = [2, 8, 8], strides = [1, 1, 1]} : vector<2x8x96xf32> to vector<2x8x8xf32>
    %235 = vector.extract_strided_slice %172 {offsets = [0, 0, 56], sizes = [2, 8, 8], strides = [1, 1, 1]} : vector<2x8x96xf32> to vector<2x8x8xf32>
    %236 = vector.extract_strided_slice %172 {offsets = [0, 0, 88], sizes = [2, 8, 8], strides = [1, 1, 1]} : vector<2x8x96xf32> to vector<2x8x8xf32>
    "tpu.trace_start"() <{level = 10 : i32, message = "bqd,bkd->bqk"}> : () -> ()
    %cst_84 = arith.constant dense<0.000000e+00> : vector<2x8x8xf32>
    %237 = tpu.matmul %234, %235, %cst_84 {dimension_numbers = #tpu.dot_dimension_numbers<[2], [2], [1], [1], [0, 0, 0, 1, 1, 1], [0], [0]>} : vector<2x8x8xf32>, vector<2x8x8xf32>, vector<2x8x8xf32> -> vector<2x8x8xf32>
    "tpu.trace_stop"() : () -> ()
    %cst_85 = arith.constant dense<0xFF800000> : vector<2x8xf32>
    %238 = vector.multi_reduction <maximumf>, %237, %cst_85 [2] : vector<2x8x8xf32> to vector<2x8xf32>
    %239 = vector.shape_cast %238 : vector<2x8xf32> to vector<2x8x1xf32>
    %240 = vector.broadcast %239 : vector<2x8x1xf32> to vector<2x8x8xf32>
    %241 = arith.subf %237, %240 : vector<2x8x8xf32>
    %242 = math.exp %241 : vector<2x8x8xf32>
    %cst_86 = arith.constant dense<0.000000e+00> : vector<2x8xf32>
    %243 = vector.multi_reduction <add>, %242, %cst_86 [2] : vector<2x8x8xf32> to vector<2x8xf32>
    %244 = vector.shape_cast %243 : vector<2x8xf32> to vector<2x8x1xf32>
    %245 = tpu.reciprocal %244 {approx = true} : vector<2x8x1xf32> -> vector<2x8x1xf32>
    %246 = vector.broadcast %245 : vector<2x8x1xf32> to vector<2x8x8xf32>
    %247 = arith.mulf %242, %246 : vector<2x8x8xf32>
    "tpu.trace_start"() <{level = 10 : i32, message = "bqk,bkd->bqd"}> : () -> ()
    %cst_87 = arith.constant dense<0.000000e+00> : vector<2x8x8xf32>
    %248 = tpu.matmul %247, %236, %cst_87 {dimension_numbers = #tpu.dot_dimension_numbers<[2], [1], [1], [2], [0, 0, 0, 1, 1, 2], [0], [0]>} : vector<2x8x8xf32>, vector<2x8x8xf32>, vector<2x8x8xf32> -> vector<2x8x8xf32>
    "tpu.trace_stop"() : () -> ()
    %249 = vector.shape_cast %248 : vector<2x8x8xf32> to vector<16x8xf32>
    %c7 = arith.constant 7 : index
    %c0_88 = arith.constant 0 : index
    %c0_89 = arith.constant 0 : index
    %250 = vector.load %arg3[%c7, %c0_88, %c0_89] : memref<8x8x32xf32, #tpu.memory_space<vmem>>, vector<1x8x32xf32>
    %251 = vector.shape_cast %250 : vector<1x8x32xf32> to vector<8x32xf32>
    %cst_90 = arith.constant dense<0.000000e+00> : vector<16x32xf32>
    %252 = tpu.matmul %249, %251, %cst_90 {dimension_numbers = #tpu.dot_dimension_numbers<[1], [0], [0], [1], [0, 0, 1, 1], [], []>} : vector<16x8xf32>, vector<8x32xf32>, vector<16x32xf32> -> vector<16x32xf32>
    %253 = arith.addf %233, %252 : vector<16x32xf32>
    %254 = arith.addf %156, %253 : vector<16x32xf32>
    %cst_91 = arith.constant dense<0.000000e+00> : vector<16xf32>
    %255 = vector.multi_reduction <add>, %254, %cst_91 [1] : vector<16x32xf32> to vector<16xf32>
    %256 = vector.shape_cast %255 : vector<16xf32> to vector<16x1xf32>
    %cst_92 = arith.constant 3.200000e+01 : f32
    %257 = vector.broadcast %cst_92 : f32 to vector<16x1xf32>
    %258 = arith.divf %256, %257 : vector<16x1xf32>
    %259 = arith.mulf %254, %254 : vector<16x32xf32>
    %cst_93 = arith.constant dense<0.000000e+00> : vector<16xf32>
    %260 = vector.multi_reduction <add>, %259, %cst_93 [1] : vector<16x32xf32> to vector<16xf32>
    %261 = vector.shape_cast %260 : vector<16xf32> to vector<16x1xf32>
    %cst_94 = arith.constant 3.200000e+01 : f32
    %262 = vector.broadcast %cst_94 : f32 to vector<16x1xf32>
    %263 = arith.divf %261, %262 : vector<16x1xf32>
    %264 = arith.mulf %258, %258 : vector<16x1xf32>
    %265 = arith.subf %263, %264 : vector<16x1xf32>
    %266 = vector.broadcast %258 : vector<16x1xf32> to vector<16x32xf32>
    %267 = arith.subf %254, %266 : vector<16x32xf32>
    %cst_95 = arith.constant 9.99999974E-6 : f32
    %268 = vector.broadcast %cst_95 : f32 to vector<16x1xf32>
    %269 = arith.addf %265, %268 : vector<16x1xf32>
    %270 = math.rsqrt %269 : vector<16x1xf32>
    %271 = vector.broadcast %270 : vector<16x1xf32> to vector<16x32xf32>
    %272 = arith.mulf %267, %271 : vector<16x32xf32>
    %273 = vector.broadcast %161 : vector<1x32xf32> to vector<16x32xf32>
    %274 = arith.mulf %272, %273 : vector<16x32xf32>
    %275 = vector.broadcast %162 : vector<1x32xf32> to vector<16x32xf32>
    %276 = arith.addf %274, %275 : vector<16x32xf32>
    %c1_96 = arith.constant 1 : index
    %c0_97 = arith.constant 0 : index
    %c0_98 = arith.constant 0 : index
    %277 = vector.load %arg4[%c1_96, %c0_97, %c0_98] : memref<2x32x64xf32, #tpu.memory_space<vmem>>, vector<1x32x64xf32>
    %278 = vector.shape_cast %277 : vector<1x32x64xf32> to vector<32x64xf32>
    %cst_99 = arith.constant dense<0.000000e+00> : vector<16x64xf32>
    %279 = tpu.matmul %276, %278, %cst_99 {dimension_numbers = #tpu.dot_dimension_numbers<[1], [0], [0], [1], [0, 0, 1, 1], [], []>} : vector<16x32xf32>, vector<32x64xf32>, vector<16x64xf32> -> vector<16x64xf32>
    %280 = vector.broadcast %163 : vector<1x64xf32> to vector<16x64xf32>
    %281 = arith.addf %279, %280 : vector<16x64xf32>
    %cst_100 = arith.constant 0.000000e+00 : f32
    %282 = vector.broadcast %cst_100 : f32 to vector<16x64xf32>
    %283 = arith.maximumf %281, %282 : vector<16x64xf32>
    %c1_101 = arith.constant 1 : index
    %c0_102 = arith.constant 0 : index
    %c0_103 = arith.constant 0 : index
    %284 = vector.load %arg5[%c1_101, %c0_102, %c0_103] : memref<2x64x32xf32, #tpu.memory_space<vmem>>, vector<1x64x32xf32>
    %285 = vector.shape_cast %284 : vector<1x64x32xf32> to vector<64x32xf32>
    %cst_104 = arith.constant dense<0.000000e+00> : vector<16x32xf32>
    %286 = tpu.matmul %283, %285, %cst_104 {dimension_numbers = #tpu.dot_dimension_numbers<[1], [0], [0], [1], [0, 0, 1, 1], [], []>} : vector<16x64xf32>, vector<64x32xf32>, vector<16x32xf32> -> vector<16x32xf32>
    %287 = vector.broadcast %164 : vector<1x32xf32> to vector<16x32xf32>
    %288 = arith.addf %286, %287 : vector<16x32xf32>
    %289 = arith.addf %276, %288 : vector<16x32xf32>
    %cst_105 = arith.constant dense<0.000000e+00> : vector<16xf32>
    %290 = vector.multi_reduction <add>, %289, %cst_105 [1] : vector<16x32xf32> to vector<16xf32>
    %291 = vector.shape_cast %290 : vector<16xf32> to vector<16x1xf32>
    %cst_106 = arith.constant 3.200000e+01 : f32
    %292 = vector.broadcast %cst_106 : f32 to vector<16x1xf32>
    %293 = arith.divf %291, %292 : vector<16x1xf32>
    %294 = arith.mulf %289, %289 : vector<16x32xf32>
    %cst_107 = arith.constant dense<0.000000e+00> : vector<16xf32>
    %295 = vector.multi_reduction <add>, %294, %cst_107 [1] : vector<16x32xf32> to vector<16xf32>
    %296 = vector.shape_cast %295 : vector<16xf32> to vector<16x1xf32>
    %cst_108 = arith.constant 3.200000e+01 : f32
    %297 = vector.broadcast %cst_108 : f32 to vector<16x1xf32>
    %298 = arith.divf %296, %297 : vector<16x1xf32>
    %299 = arith.mulf %293, %293 : vector<16x1xf32>
    %300 = arith.subf %298, %299 : vector<16x1xf32>
    %301 = vector.broadcast %293 : vector<16x1xf32> to vector<16x32xf32>
    %302 = arith.subf %289, %301 : vector<16x32xf32>
    %cst_109 = arith.constant 9.99999974E-6 : f32
    %303 = vector.broadcast %cst_109 : f32 to vector<16x1xf32>
    %304 = arith.addf %300, %303 : vector<16x1xf32>
    %305 = math.rsqrt %304 : vector<16x1xf32>
    %306 = vector.broadcast %305 : vector<16x1xf32> to vector<16x32xf32>
    %307 = arith.mulf %302, %306 : vector<16x32xf32>
    %308 = vector.broadcast %165 : vector<1x32xf32> to vector<16x32xf32>
    %309 = arith.mulf %307, %308 : vector<16x32xf32>
    %310 = vector.broadcast %166 : vector<1x32xf32> to vector<16x32xf32>
    %311 = arith.addf %309, %310 : vector<16x32xf32>
    %c0_110 = arith.constant 0 : index
    %c0_111 = arith.constant 0 : index
    %312 = vector.load %arg7[%c0_110, %c0_111] : memref<32x16xf32, #tpu.memory_space<vmem>>, vector<32x16xf32>
    %cst_112 = arith.constant dense<0.000000e+00> : vector<16x16xf32>
    %313 = tpu.matmul %311, %312, %cst_112 {dimension_numbers = #tpu.dot_dimension_numbers<[1], [0], [0], [1], [0, 0, 1, 1], [], []>} : vector<16x32xf32>, vector<32x16xf32>, vector<16x16xf32> -> vector<16x16xf32>
    %c0_113 = arith.constant 0 : index
    %c0_114 = arith.constant 0 : index
    %314 = vector.load %arg8[%c0_113, %c0_114] : memref<1x16xf32, #tpu.memory_space<vmem>>, vector<1x16xf32>
    %315 = vector.broadcast %314 : vector<1x16xf32> to vector<16x16xf32>
    %316 = arith.addf %313, %315 : vector<16x16xf32>
    %317 = vector.shape_cast %316 : vector<16x16xf32> to vector<2x8x16xf32>
    %c0_115 = arith.constant 0 : index
    %c0_116 = arith.constant 0 : index
    %c0_117 = arith.constant 0 : index
    %318 = vector.load %arg9[%c0_115, %c0_116, %c0_117] : memref<2x8x16xf32, #tpu.memory_space<vmem>>, vector<2x8x16xf32>
    tpu.vector_store %arg9[%c0_115, %c0_116, %c0_117], %317 {strides = array<i32>} : memref<2x8x16xf32, #tpu.memory_space<vmem>>, vector<2x8x16xf32>,
    return
  }
  func.func @transform_0(%arg0: i32) -> (i32, i32, i32) {
    %c0_i32 = arith.constant 0 : i32
    %c0_i32_0 = arith.constant 0 : i32
    %c0_i32_1 = arith.constant 0 : i32
    return %arg0, %c0_i32, %c0_i32_0 : i32, i32, i32
  }
  func.func @transform_1(%arg0: i32) -> (i32, i32, i32) {
    %c0_i32 = arith.constant 0 : i32
    %c0_i32_0 = arith.constant 0 : i32
    %c0_i32_1 = arith.constant 0 : i32
    %c0_i32_2 = arith.constant 0 : i32
    return %c0_i32, %c0_i32_0, %c0_i32_1 : i32, i32, i32
  }
  func.func @transform_2(%arg0: i32) -> (i32, i32, i32) {
    %c0_i32 = arith.constant 0 : i32
    %c0_i32_0 = arith.constant 0 : i32
    %c0_i32_1 = arith.constant 0 : i32
    %c0_i32_2 = arith.constant 0 : i32
    return %c0_i32, %c0_i32_0, %c0_i32_1 : i32, i32, i32
  }
  func.func @transform_3(%arg0: i32) -> (i32, i32, i32) {
    %c0_i32 = arith.constant 0 : i32
    %c0_i32_0 = arith.constant 0 : i32
    %c0_i32_1 = arith.constant 0 : i32
    %c0_i32_2 = arith.constant 0 : i32
    return %c0_i32, %c0_i32_0, %c0_i32_1 : i32, i32, i32
  }
  func.func @transform_4(%arg0: i32) -> (i32, i32, i32) {
    %c0_i32 = arith.constant 0 : i32
    %c0_i32_0 = arith.constant 0 : i32
    %c0_i32_1 = arith.constant 0 : i32
    %c0_i32_2 = arith.constant 0 : i32
    return %c0_i32, %c0_i32_0, %c0_i32_1 : i32, i32, i32
  }
  func.func @transform_5(%arg0: i32) -> (i32, i32, i32) {
    %c0_i32 = arith.constant 0 : i32
    %c0_i32_0 = arith.constant 0 : i32
    %c0_i32_1 = arith.constant 0 : i32
    %c0_i32_2 = arith.constant 0 : i32
    return %c0_i32, %c0_i32_0, %c0_i32_1 : i32, i32, i32
  }
  func.func @transform_6(%arg0: i32) -> (i32, i32) {
    %c0_i32 = arith.constant 0 : i32
    %c0_i32_0 = arith.constant 0 : i32
    %c0_i32_1 = arith.constant 0 : i32
    return %c0_i32, %c0_i32_0 : i32, i32
  }
  func.func @transform_7(%arg0: i32) -> (i32, i32) {
    %c0_i32 = arith.constant 0 : i32
    %c0_i32_0 = arith.constant 0 : i32
    %c0_i32_1 = arith.constant 0 : i32
    return %c0_i32, %c0_i32_0 : i32, i32
  }
  func.func @transform_8(%arg0: i32) -> (i32, i32, i32) {
    %c0_i32 = arith.constant 0 : i32
    %c0_i32_0 = arith.constant 0 : i32
    %c0_i32_1 = arith.constant 0 : i32
    return %arg0, %c0_i32, %c0_i32_0 : i32, i32, i32
  }
}

</mosaic_0001>

<llo_original>
// kernel: tpu_custom_call.1
$region0: #{tpu_custom_call.1}
  #allocation0 [shape = 'u32[]', space=smem, size = 0x4, offset = 0x4, fixed_abs, tag = 'smem constant byte address 0x4 - core index']
  #allocation1 [shape = 'u32[72,128]{1,0:T(1,128)}', space=vmem, size = 0x9000, scoped, tag = 'internal scratch']
  %s0 = inlined_call_operand.vmem [shape: f32[2,8,32], index: 0, kind: input, shape index: {}]
  %s1 = inlined_call_operand.vmem [shape: f32[2,32,96], index: 1, kind: input, shape index: {}]
  %s2 = inlined_call_operand.vmem [shape: f32[8,8,32], index: 2, kind: input, shape index: {}]
  %s3 = inlined_call_operand.vmem [shape: f32[2,32,64], index: 3, kind: input, shape index: {}]
  %s4 = inlined_call_operand.vmem [shape: f32[2,64,32], index: 4, kind: input, shape index: {}]
  %s5 = inlined_call_operand.vmem [shape: f32[2,8,96], index: 5, kind: input, shape index: {}]
  %s6 = inlined_call_operand.vmem [shape: f32[32,16], index: 6, kind: input, shape index: {}]
  %s7 = inlined_call_operand.vmem [shape: f32[1,16], index: 7, kind: input, shape index: {}]
  %s8 = inlined_call_operand.hbm [shape: f32[2,8,16], index: 8, kind: output, shape index: {}]
  %s9 = sld [smem:[#allocation0]]
  $region42: #{tpu_custom_call.1} parent=0
    _
  %s11 = ssub.s32 1, %s9
  %s12 = scalar_select 0, %s11, %s9
  $region1: #{tpu_custom_call.1} parent=0
    #allocation2 [shape = 'u8[8192]{0}', space=vmem, size = 0x2000, scoped, tag = 'output window, operand 0, single buffered']
    #allocation3 [shape = 's32[1]{0}', space=sflag, size = 0x4, scoped, tag = 'scoped memory for tpu_custom_call.1']
    %13 = vsyncpa [#allocation3], 0
    // Predicated region
    $region2: #{tpu_custom_call.1} parent=1 // pred_check
      _
    $region3: #{tpu_custom_call.1} parent=1 // pred_check_branch
      %15 = sbr.rel (0) target = $region5
    $region4: #{tpu_custom_call.1} parent=1 // pred_region
      _
    $region5: #{tpu_custom_call.1} parent=1 // pred_fallthru
      _
    // Predicated region
    $region6: #{tpu_custom_call.1} parent=1 // pred_check
      _
    $region7: #{tpu_custom_call.1} parent=1 // pred_check_branch
      %17 = sbr.rel (0) target = $region9
    $region8: #{tpu_custom_call.1} parent=1 // pred_region
      _
    $region9: #{tpu_custom_call.1} parent=1 // pred_fallthru
      _
    // Predicated region
    $region10: #{tpu_custom_call.1} parent=1 // pred_check
      _
    $region11: #{tpu_custom_call.1} parent=1 // pred_check_branch
      %19 = sbr.rel (0) target = $region13
    $region12: #{tpu_custom_call.1} parent=1 // pred_region
      _
    $region13: #{tpu_custom_call.1} parent=1 // pred_fallthru
      _
    // Predicated region
    $region14: #{tpu_custom_call.1} parent=1 // pred_check
      _
    $region15: #{tpu_custom_call.1} parent=1 // pred_check_branch
      %21 = sbr.rel (0) target = $region17
    $region16: #{tpu_custom_call.1} parent=1 // pred_region
      _
    $region17: #{tpu_custom_call.1} parent=1 // pred_fallthru
      _
    // Predicated region
    $region18: #{tpu_custom_call.1} parent=1 // pred_check
      _
    $region19: #{tpu_custom_call.1} parent=1 // pred_check_branch
      %23 = sbr.rel (0) target = $region21
    $region20: #{tpu_custom_call.1} parent=1 // pred_region
      _
    $region21: #{tpu_custom_call.1} parent=1 // pred_fallthru
      _
    // Predicated region
    $region22: #{tpu_custom_call.1} parent=1 // pred_check
      _
    $region23: #{tpu_custom_call.1} parent=1 // pred_check_branch
      %25 = sbr.rel (0) target = $region25
    $region24: #{tpu_custom_call.1} parent=1 // pred_region
      _
    $region25: #{tpu_custom_call.1} parent=1 // pred_fallthru
      _
    // Predicated region
    $region26: #{tpu_custom_call.1} parent=1 // pred_check
      _
    $region27: #{tpu_custom_call.1} parent=1 // pred_check_branch
      %27 = sbr.rel (0) target = $region29
    $region28: #{tpu_custom_call.1} parent=1 // pred_region
      _
    $region29: #{tpu_custom_call.1} parent=1 // pred_fallthru
      _
    // Predicated region
    $region30: #{tpu_custom_call.1} parent=1 // pred_check
      _
    $region31: #{tpu_custom_call.1} parent=1 // pred_check_branch
      %29 = sbr.rel (0) target = $region33
    $region32: #{tpu_custom_call.1} parent=1 // pred_region
      _
    $region33: #{tpu_custom_call.1} parent=1 // pred_fallthru
      _
    %v30 = vld [vmem:[%s0] sm:$0xff]
    %v31 = vld [vmem:[%s0 + $0x8] sm:$0xff]
    %v32 = vld [vmem:[%s5] sm:$0xff]
    %v33 = vld [vmem:[%s1] sm:$0xff]
    %v34 = vld [vmem:[%s1 + $0x8] sm:$0xff]
    %v35 = vld [vmem:[%s1 + $0x10] sm:$0xff]
    %v36 = vld [vmem:[%s1 + $0x18] sm:$0xff]
    %v37 = vperm.slane %v32, 0
    %vm38 = vcmask 261120
    %v40 = vsel %vm38, %v30, 0
    %v43 = vsel %vm38, %v31, 0
    %45 = vmatpush.msra.mxu0 0.0
    %46 = vmatpush.msra.mxu0 0.0
    %47 = vmatpush.msra.mxu0 0.0
    %48 = vmatpush.msra.mxu0 0.0
    %49 = vmatpush.msra.mxu0 0.0
    %50 = vmatpush.msra.mxu0 0.0
    %51 = vmatpush.msra.mxu0 0.0
    %52 = vmatpush.msra.mxu0 0.0
    %53 = vmatpush.msra.mxu0 0.0
    %54 = vmatpush.msra.mxu0 0.0
    %55 = vmatpush.msra.mxu0 0.0
    %56 = vmatpush.msra.mxu0 0.0
    %57 = vmatpush.msra.mxu0 %v36
    %58 = vmatpush.msra.mxu0 %v35
    %59 = vmatpush.msra.mxu0 %v34
    %60 = vmatpush.msra.mxu0 %v33
    %61 = vmatmul.f32.gmra.mxu0 %v40
    %v62 = vpop.f32.mrf.mxu0
    %v63 = vadd.f32 %v37, %v62
    %64 = vmatmul.f32.gmra.mxu0 %v43
    %v65 = vpop.f32.mrf.mxu0
    %v66 = vadd.f32 %v37, %v65
    %67 = vdwg.mxu0
    %69 = vrot.lane.b32.xlu0 %v63, 96
    %v70 = vpop.permute.xlu0 %69
    %vm71 = vcmask 64512
    %v72 = vsel %vm71, %v63, 0
    %v74 = vsel %vm71, %v70, 0
    %76 = vmatpush.xpose.msra.mxu0 0.0
    %77 = vmatpush.xpose.msra.mxu0 0.0
    %78 = vmatpush.xpose.msra.mxu0 0.0
    %79 = vmatpush.xpose.msra.mxu0 0.0
    %80 = vmatpush.xpose.msra.mxu0 0.0
    %81 = vmatpush.xpose.msra.mxu0 0.0
    %82 = vmatpush.xpose.msra.mxu0 0.0
    %83 = vmatpush.xpose.msra.mxu0 0.0
    %84 = vmatpush.xpose.msra.mxu0 0.0
    %85 = vmatpush.xpose.msra.mxu0 0.0
    %86 = vmatpush.xpose.msra.mxu0 0.0
    %87 = vmatpush.xpose.msra.mxu0 0.0
    %88 = vmatpush.xpose.msra.mxu0 0.0
    %89 = vmatpush.xpose.msra.mxu0 0.0
    %90 = vmatpush.xpose.msra.mxu0 0.0
    %91 = vmatpush.xpose.msra.mxu0 %v74
    %92 = vmatmul.f32.gmra.mxu0 %v72
    %v93 = vpop.f32.mrf.mxu0
    %v94 = vadd.f32 0.0, %v93
    %95 = vdwg.mxu0
    %97 = vrot.lane.b32.xlu0 %v66, 96
    %v98 = vpop.permute.xlu0 %97
    %v99 = vsel %vm71, %v66, 0
    %v101 = vsel %vm71, %v98, 0
    %103 = vmatpush.xpose.msra.mxu0 0.0
    %104 = vmatpush.xpose.msra.mxu0 0.0
    %105 = vmatpush.xpose.msra.mxu0 0.0
    %106 = vmatpush.xpose.msra.mxu0 0.0
    %107 = vmatpush.xpose.msra.mxu0 0.0
    %108 = vmatpush.xpose.msra.mxu0 0.0
    %109 = vmatpush.xpose.msra.mxu0 0.0
    %110 = vmatpush.xpose.msra.mxu0 0.0
    %111 = vmatpush.xpose.msra.mxu0 0.0
    %112 = vmatpush.xpose.msra.mxu0 0.0
    %113 = vmatpush.xpose.msra.mxu0 0.0
    %114 = vmatpush.xpose.msra.mxu0 0.0
    %115 = vmatpush.xpose.msra.mxu0 0.0
    %116 = vmatpush.xpose.msra.mxu0 0.0
    %117 = vmatpush.xpose.msra.mxu0 0.0
    %118 = vmatpush.xpose.msra.mxu0 %v101
    %119 = vmatmul.f32.gmra.mxu0 %v99
    %v120 = vpop.f32.mrf.mxu0
    %v121 = vadd.f32 0.0, %v120
    %122 = vdwg.mxu0
    %v123 = vsel %vm71, %v94, -inf
    %124 = vmax.xlane.f32.xlu0 %v123
    %v125 = vpop.xlane.xlu0 %124
    %v126 = vsel %vm71, %v121, -inf
    %127 = vmax.xlane.f32.xlu0 %v126
    %v128 = vpop.xlane.xlu0 %127
    %v129 = vsub.f32 %v94, %v125
    %v130 = vsub.f32 %v121, %v128
    %v131 = vmul.f32 %v129, 1.442695
    %v132 = vpow.pop %v131
    %v133 = vmul.f32 %v130, 1.442695
    %v134 = vpow.pop %v133
    %v135 = vsel %vm71, %v132, 0.0
    %136 = vadd.xlane.f32.xlu0 %v135
    %v137 = vpop.xlane.xlu0 %136
    %v138 = vsel %vm71, %v134, 0.0
    %139 = vadd.xlane.f32.xlu0 %v138
    %v140 = vpop.xlane.xlu0 %139
    %v141 = vrcp.pop %v137
    %v142 = vrcp.pop %v140
    %v143 = vmul.f32 %v132, %v141
    %v144 = vmul.f32 %v134, %v142
    %145 = vrot.lane.b32.xlu0 %v63, 64
    %v146 = vpop.permute.xlu0 %145
    %v149 = vsel %vm71, %v143, 0
    %151 = vmatpush.msra.mxu0 0.0
    %152 = vmatpush.msra.mxu0 0.0
    %153 = vmatpush.msra.mxu0 0.0
    %154 = vmatpush.msra.mxu0 0.0
    %155 = vmatpush.msra.mxu0 0.0
    %156 = vmatpush.msra.mxu0 0.0
    %157 = vmatpush.msra.mxu0 0.0
    %158 = vmatpush.msra.mxu0 0.0
    %159 = vmatpush.msra.mxu0 0.0
    %160 = vmatpush.msra.mxu0 0.0
    %161 = vmatpush.msra.mxu0 0.0
    %162 = vmatpush.msra.mxu0 0.0
    %163 = vmatpush.msra.mxu0 0.0
    %164 = vmatpush.msra.mxu0 0.0
    %165 = vmatpush.msra.mxu0 0.0
    %166 = vmatpush.msra.mxu0 %v146
    %167 = vmatmul.f32.gmra.mxu0 %v149
    %v168 = vpop.f32.mrf.mxu0
    %v169 = vadd.f32 0.0, %v168
    %170 = vdwg.mxu0
    %171 = vrot.lane.b32.xlu0 %v66, 64
    %v172 = vpop.permute.xlu0 %171
    %v175 = vsel %vm71, %v144, 0
    %177 = vmatpush.msra.mxu0 0.0
    %178 = vmatpush.msra.mxu0 0.0
    %179 = vmatpush.msra.mxu0 0.0
    %180 = vmatpush.msra.mxu0 0.0
    %181 = vmatpush.msra.mxu0 0.0
    %182 = vmatpush.msra.mxu0 0.0
    %183 = vmatpush.msra.mxu0 0.0
    %184 = vmatpush.msra.mxu0 0.0
    %185 = vmatpush.msra.mxu0 0.0
    %186 = vmatpush.msra.mxu0 0.0
    %187 = vmatpush.msra.mxu0 0.0
    %188 = vmatpush.msra.mxu0 0.0
    %189 = vmatpush.msra.mxu0 0.0
    %190 = vmatpush.msra.mxu0 0.0
    %191 = vmatpush.msra.mxu0 0.0
    %192 = vmatpush.msra.mxu0 %v172
    %193 = vmatmul.f32.gmra.mxu0 %v175
    %v194 = vpop.f32.mrf.mxu0
    %v195 = vadd.f32 0.0, %v194
    %196 = vdwg.mxu0
    %v197 = vld [vmem:[%s2] sm:$0xff]
    %v199 = vsel %vm71, %v169, 0
    %v202 = vsel %vm71, %v195, 0
    %204 = vmatpush.msra.mxu0 0.0
    %205 = vmatpush.msra.mxu0 0.0
    %206 = vmatpush.msra.mxu0 0.0
    %207 = vmatpush.msra.mxu0 0.0
    %208 = vmatpush.msra.mxu0 0.0
    %209 = vmatpush.msra.mxu0 0.0
    %210 = vmatpush.msra.mxu0 0.0
    %211 = vmatpush.msra.mxu0 0.0
    %212 = vmatpush.msra.mxu0 0.0
    %213 = vmatpush.msra.mxu0 0.0
    %214 = vmatpush.msra.mxu0 0.0
    %215 = vmatpush.msra.mxu0 0.0
    %216 = vmatpush.msra.mxu0 0.0
    %217 = vmatpush.msra.mxu0 0.0
    %218 = vmatpush.msra.mxu0 0.0
    %219 = vmatpush.msra.mxu0 %v197
    %220 = vmatmul.f32.gmra.mxu0 %v199
    %v221 = vpop.f32.mrf.mxu0
    %v222 = vadd.f32 0.0, %v221
    %223 = vmatmul.f32.gmra.mxu0 %v202
    %v224 = vpop.f32.mrf.mxu0
    %v225 = vadd.f32 0.0, %v224
    %226 = vdwg.mxu0
    %v227 = vperm.slane %v32, 1
    %v228 = vadd.f32 %v227, %v222
    %v229 = vadd.f32 %v227, %v225
    %230 = vrot.lane.b32.xlu0 %v63, 120
    %v231 = vpop.permute.xlu0 %230
    %232 = vrot.lane.b32.xlu0 %v63, 88
    %v233 = vpop.permute.xlu0 %232
    %v234 = vsel %vm71, %v231, 0
    %v236 = vsel %vm71, %v233, 0
    %238 = vmatpush.xpose.msra.mxu0 0.0
    %239 = vmatpush.xpose.msra.mxu0 0.0
    %240 = vmatpush.xpose.msra.mxu0 0.0
    %241 = vmatpush.xpose.msra.mxu0 0.0
    %242 = vmatpush.xpose.msra.mxu0 0.0
    %243 = vmatpush.xpose.msra.mxu0 0.0
    %244 = vmatpush.xpose.msra.mxu0 0.0
    %245 = vmatpush.xpose.msra.mxu0 0.0
    %246 = vmatpush.xpose.msra.mxu0 0.0
    %247 = vmatpush.xpose.msra.mxu0 0.0
    %248 = vmatpush.xpose.msra.mxu0 0.0
    %249 = vmatpush.xpose.msra.mxu0 0.0
    %250 = vmatpush.xpose.msra.mxu0 0.0
    %251 = vmatpush.xpose.msra.mxu0 0.0
    %252 = vmatpush.xpose.msra.mxu0 0.0
    %253 = vmatpush.xpose.msra.mxu0 %v236
    %254 = vmatmul.f32.gmra.mxu0 %v234
    %v255 = vpop.f32.mrf.mxu0
    %v256 = vadd.f32 0.0, %v255
    %257 = vdwg.mxu0
    %258 = vrot.lane.b32.xlu0 %v66, 120
    %v259 = vpop.permute.xlu0 %258
    %260 = vrot.lane.b32.xlu0 %v66, 88
    %v261 = vpop.permute.xlu0 %260
    %v262 = vsel %vm71, %v259, 0
    %v264 = vsel %vm71, %v261, 0
    %266 = vmatpush.xpose.msra.mxu0 0.0
    %267 = vmatpush.xpose.msra.mxu0 0.0
    %268 = vmatpush.xpose.msra.mxu0 0.0
    %269 = vmatpush.xpose.msra.mxu0 0.0
    %270 = vmatpush.xpose.msra.mxu0 0.0
    %271 = vmatpush.xpose.msra.mxu0 0.0
    %272 = vmatpush.xpose.msra.mxu0 0.0
    %273 = vmatpush.xpose.msra.mxu0 0.0
    %274 = vmatpush.xpose.msra.mxu0 0.0
    %275 = vmatpush.xpose.msra.mxu0 0.0
    %276 = vmatpush.xpose.msra.mxu0 0.0
    %277 = vmatpush.xpose.msra.mxu0 0.0
    %278 = vmatpush.xpose.msra.mxu0 0.0
    %279 = vmatpush.xpose.msra.mxu0 0.0
    %280 = vmatpush.xpose.msra.mxu0 0.0
    %281 = vmatpush.xpose.msra.mxu0 %v264
    %282 = vmatmul.f32.gmra.mxu0 %v262
    %v283 = vpop.f32.mrf.mxu0
    %v284 = vadd.f32 0.0, %v283
    %285 = vdwg.mxu0
    %v286 = vsel %vm71, %v256, -inf
    %287 = vmax.xlane.f32.xlu0 %v286
    %v288 = vpop.xlane.xlu0 %287
    %v289 = vsel %vm71, %v284, -inf
    %290 = vmax.xlane.f32.xlu0 %v289
    %v291 = vpop.xlane.xlu0 %290
    %v292 = vsub.f32 %v256, %v288
    %v293 = vsub.f32 %v284, %v291
    %v294 = vmul.f32 %v292, 1.442695
    %v295 = vpow.pop %v294
    %v296 = vmul.f32 %v293, 1.442695
    %v297 = vpow.pop %v296
    %v298 = vsel %vm71, %v295, 0.0
    %299 = vadd.xlane.f32.xlu0 %v298
    %v300 = vpop.xlane.xlu0 %299
    %v301 = vsel %vm71, %v297, 0.0
    %302 = vadd.xlane.f32.xlu0 %v301
    %v303 = vpop.xlane.xlu0 %302
    %v304 = vrcp.pop %v300
    %v305 = vrcp.pop %v303
    %v306 = vmul.f32 %v295, %v304
    %v307 = vmul.f32 %v297, %v305
    %308 = vrot.lane.b32.xlu0 %v63, 56
    %v309 = vpop.permute.xlu0 %308
    %v312 = vsel %vm71, %v306, 0
    %314 = vmatpush.msra.mxu0 0.0
    %315 = vmatpush.msra.mxu0 0.0
    %316 = vmatpush.msra.mxu0 0.0
    %317 = vmatpush.msra.mxu0 0.0
    %318 = vmatpush.msra.mxu0 0.0
    %319 = vmatpush.msra.mxu0 0.0
    %320 = vmatpush.msra.mxu0 0.0
    %321 = vmatpush.msra.mxu0 0.0
    %322 = vmatpush.msra.mxu0 0.0
    %323 = vmatpush.msra.mxu0 0.0
    %324 = vmatpush.msra.mxu0 0.0
    %325 = vmatpush.msra.mxu0 0.0
    %326 = vmatpush.msra.mxu0 0.0
    %327 = vmatpush.msra.mxu0 0.0
    %328 = vmatpush.msra.mxu0 0.0
    %329 = vmatpush.msra.mxu0 %v309
    %330 = vmatmul.f32.gmra.mxu0 %v312
    %v331 = vpop.f32.mrf.mxu0
    %v332 = vadd.f32 0.0, %v331
    %333 = vdwg.mxu0
    %334 = vrot.lane.b32.xlu0 %v66, 56
    %v335 = vpop.permute.xlu0 %334
    %v338 = vsel %vm71, %v307, 0
    %340 = vmatpush.msra.mxu0 0.0
    %341 = vmatpush.msra.mxu0 0.0
    %342 = vmatpush.msra.mxu0 0.0
    %343 = vmatpush.msra.mxu0 0.0
    %344 = vmatpush.msra.mxu0 0.0
    %345 = vmatpush.msra.mxu0 0.0
    %346 = vmatpush.msra.mxu0 0.0
    %347 = vmatpush.msra.mxu0 0.0
    %348 = vmatpush.msra.mxu0 0.0
    %349 = vmatpush.msra.mxu0 0.0
    %350 = vmatpush.msra.mxu0 0.0
    %351 = vmatpush.msra.mxu0 0.0
    %352 = vmatpush.msra.mxu0 0.0
    %353 = vmatpush.msra.mxu0 0.0
    %354 = vmatpush.msra.mxu0 0.0
    %355 = vmatpush.msra.mxu0 %v335
    %356 = vmatmul.f32.gmra.mxu0 %v338
    %v357 = vpop.f32.mrf.mxu0
    %v358 = vadd.f32 0.0, %v357
    %359 = vdwg.mxu0
    %s360 = scalar_lea.vmem %s2, 8
    %v361 = vld [vmem:[%s360] sm:$0xff]
    %v363 = vsel %vm71, %v332, 0
    %v366 = vsel %vm71, %v358, 0
    %368 = vmatpush.msra.mxu0 0.0
    %369 = vmatpush.msra.mxu0 0.0
    %370 = vmatpush.msra.mxu0 0.0
    %371 = vmatpush.msra.mxu0 0.0
    %372 = vmatpush.msra.mxu0 0.0
    %373 = vmatpush.msra.mxu0 0.0
    %374 = vmatpush.msra.mxu0 0.0
    %375 = vmatpush.msra.mxu0 0.0
    %376 = vmatpush.msra.mxu0 0.0
    %377 = vmatpush.msra.mxu0 0.0
    %378 = vmatpush.msra.mxu0 0.0
    %379 = vmatpush.msra.mxu0 0.0
    %380 = vmatpush.msra.mxu0 0.0
    %381 = vmatpush.msra.mxu0 0.0
    %382 = vmatpush.msra.mxu0 0.0
    %383 = vmatpush.msra.mxu0 %v361
    %384 = vmatmul.f32.gmra.mxu0 %v363
    %v385 = vpop.f32.mrf.mxu0
    %v386 = vadd.f32 0.0, %v385
    %387 = vmatmul.f32.gmra.mxu0 %v366
    %v388 = vpop.f32.mrf.mxu0
    %v389 = vadd.f32 0.0, %v388
    %390 = vdwg.mxu0
    %v391 = vadd.f32 %v228, %v386
    %v392 = vadd.f32 %v229, %v389
    %393 = vrot.lane.b32.xlu0 %v63, 112
    %v394 = vpop.permute.xlu0 %393
    %395 = vrot.lane.b32.xlu0 %v63, 80
    %v396 = vpop.permute.xlu0 %395
    %v397 = vsel %vm71, %v394, 0
    %v399 = vsel %vm71, %v396, 0
    %401 = vmatpush.xpose.msra.mxu0 0.0
    %402 = vmatpush.xpose.msra.mxu0 0.0
    %403 = vmatpush.xpose.msra.mxu0 0.0
    %404 = vmatpush.xpose.msra.mxu0 0.0
    %405 = vmatpush.xpose.msra.mxu0 0.0
    %406 = vmatpush.xpose.msra.mxu0 0.0
    %407 = vmatpush.xpose.msra.mxu0 0.0
    %408 = vmatpush.xpose.msra.mxu0 0.0
    %409 = vmatpush.xpose.msra.mxu0 0.0
    %410 = vmatpush.xpose.msra.mxu0 0.0
    %411 = vmatpush.xpose.msra.mxu0 0.0
    %412 = vmatpush.xpose.msra.mxu0 0.0
    %413 = vmatpush.xpose.msra.mxu0 0.0
    %414 = vmatpush.xpose.msra.mxu0 0.0
    %415 = vmatpush.xpose.msra.mxu0 0.0
    %416 = vmatpush.xpose.msra.mxu0 %v399
    %417 = vmatmul.f32.gmra.mxu0 %v397
    %v418 = vpop.f32.mrf.mxu0
    %v419 = vadd.f32 0.0, %v418
    %420 = vdwg.mxu0
    %421 = vrot.lane.b32.xlu0 %v66, 112
    %v422 = vpop.permute.xlu0 %421
    %423 = vrot.lane.b32.xlu0 %v66, 80
    %v424 = vpop.permute.xlu0 %423
    %v425 = vsel %vm71, %v422, 0
    %v427 = vsel %vm71, %v424, 0
    %429 = vmatpush.xpose.msra.mxu0 0.0
    %430 = vmatpush.xpose.msra.mxu0 0.0
    %431 = vmatpush.xpose.msra.mxu0 0.0
    %432 = vmatpush.xpose.msra.mxu0 0.0
    %433 = vmatpush.xpose.msra.mxu0 0.0
    %434 = vmatpush.xpose.msra.mxu0 0.0
    %435 = vmatpush.xpose.msra.mxu0 0.0
    %436 = vmatpush.xpose.msra.mxu0 0.0
    %437 = vmatpush.xpose.msra.mxu0 0.0
    %438 = vmatpush.xpose.msra.mxu0 0.0
    %439 = vmatpush.xpose.msra.mxu0 0.0
    %440 = vmatpush.xpose.msra.mxu0 0.0
    %441 = vmatpush.xpose.msra.mxu0 0.0
    %442 = vmatpush.xpose.msra.mxu0 0.0
    %443 = vmatpush.xpose.msra.mxu0 0.0
    %444 = vmatpush.xpose.msra.mxu0 %v427
    %445 = vmatmul.f32.gmra.mxu0 %v425
    %v446 = vpop.f32.mrf.mxu0
    %v447 = vadd.f32 0.0, %v446
    %448 = vdwg.mxu0
    %v449 = vsel %vm71, %v419, -inf
    %450 = vmax.xlane.f32.xlu0 %v449
    %v451 = vpop.xlane.xlu0 %450
    %v452 = vsel %vm71, %v447, -inf
    %453 = vmax.xlane.f32.xlu0 %v452
    %v454 = vpop.xlane.xlu0 %453
    %v455 = vsub.f32 %v419, %v451
    %v456 = vsub.f32 %v447, %v454
    %v457 = vmul.f32 %v455, 1.442695
    %v458 = vpow.pop %v457
    %v459 = vmul.f32 %v456, 1.442695
    %v460 = vpow.pop %v459
    %v461 = vsel %vm71, %v458, 0.0
    %462 = vadd.xlane.f32.xlu0 %v461
    %v463 = vpop.xlane.xlu0 %462
    %v464 = vsel %vm71, %v460, 0.0
    %465 = vadd.xlane.f32.xlu0 %v464
    %v466 = vpop.xlane.xlu0 %465
    %v467 = vrcp.pop %v463
    %v468 = vrcp.pop %v466
    %v469 = vmul.f32 %v458, %v467
    %v470 = vmul.f32 %v460, %v468
    %471 = vrot.lane.b32.xlu0 %v63, 48
    %v472 = vpop.permute.xlu0 %471
    %v475 = vsel %vm71, %v469, 0
    %477 = vmatpush.msra.mxu0 0.0
    %478 = vmatpush.msra.mxu0 0.0
    %479 = vmatpush.msra.mxu0 0.0
    %480 = vmatpush.msra.mxu0 0.0
    %481 = vmatpush.msra.mxu0 0.0
    %482 = vmatpush.msra.mxu0 0.0
    %483 = vmatpush.msra.mxu0 0.0
    %484 = vmatpush.msra.mxu0 0.0
    %485 = vmatpush.msra.mxu0 0.0
    %486 = vmatpush.msra.mxu0 0.0
    %487 = vmatpush.msra.mxu0 0.0
    %488 = vmatpush.msra.mxu0 0.0
    %489 = vmatpush.msra.mxu0 0.0
    %490 = vmatpush.msra.mxu0 0.0
    %491 = vmatpush.msra.mxu0 0.0
    %492 = vmatpush.msra.mxu0 %v472
    %493 = vmatmul.f32.gmra.mxu0 %v475
    %v494 = vpop.f32.mrf.mxu0
    %v495 = vadd.f32 0.0, %v494
    %496 = vdwg.mxu0
    %497 = vrot.lane.b32.xlu0 %v66, 48
    %v498 = vpop.permute.xlu0 %497
    %v501 = vsel %vm71, %v470, 0
    %503 = vmatpush.msra.mxu0 0.0
    %504 = vmatpush.msra.mxu0 0.0
    %505 = vmatpush.msra.mxu0 0.0
    %506 = vmatpush.msra.mxu0 0.0
    %507 = vmatpush.msra.mxu0 0.0
    %508 = vmatpush.msra.mxu0 0.0
    %509 = vmatpush.msra.mxu0 0.0
    %510 = vmatpush.msra.mxu0 0.0
    %511 = vmatpush.msra.mxu0 0.0
    %512 = vmatpush.msra.mxu0 0.0
    %513 = vmatpush.msra.mxu0 0.0
    %514 = vmatpush.msra.mxu0 0.0
    %515 = vmatpush.msra.mxu0 0.0
    %516 = vmatpush.msra.mxu0 0.0
    %517 = vmatpush.msra.mxu0 0.0
    %518 = vmatpush.msra.mxu0 %v498
    %519 = vmatmul.f32.gmra.mxu0 %v501
    %v520 = vpop.f32.mrf.mxu0
    %v521 = vadd.f32 0.0, %v520
    %522 = vdwg.mxu0
    %s523 = scalar_lea.vmem %s2, 16
    %v524 = vld [vmem:[%s523] sm:$0xff]
    %v526 = vsel %vm71, %v495, 0
    %v529 = vsel %vm71, %v521, 0
    %531 = vmatpush.msra.mxu0 0.0
    %532 = vmatpush.msra.mxu0 0.0
    %533 = vmatpush.msra.mxu0 0.0
    %534 = vmatpush.msra.mxu0 0.0
    %535 = vmatpush.msra.mxu0 0.0
    %536 = vmatpush.msra.mxu0 0.0
    %537 = vmatpush.msra.mxu0 0.0
    %538 = vmatpush.msra.mxu0 0.0
    %539 = vmatpush.msra.mxu0 0.0
    %540 = vmatpush.msra.mxu0 0.0
    %541 = vmatpush.msra.mxu0 0.0
    %542 = vmatpush.msra.mxu0 0.0
    %543 = vmatpush.msra.mxu0 0.0
    %544 = vmatpush.msra.mxu0 0.0
    %545 = vmatpush.msra.mxu0 0.0
    %546 = vmatpush.msra.mxu0 %v524
    %547 = vmatmul.f32.gmra.mxu0 %v526
    %v548 = vpop.f32.mrf.mxu0
    %v549 = vadd.f32 0.0, %v548
    %550 = vmatmul.f32.gmra.mxu0 %v529
    %v551 = vpop.f32.mrf.mxu0
    %v552 = vadd.f32 0.0, %v551
    %553 = vdwg.mxu0
    %v554 = vadd.f32 %v391, %v549
    %v555 = vadd.f32 %v392, %v552
    %556 = vrot.lane.b32.xlu0 %v63, 104
    %v557 = vpop.permute.xlu0 %556
    %558 = vrot.lane.b32.xlu0 %v63, 72
    %v559 = vpop.permute.xlu0 %558
    %v560 = vsel %vm71, %v557, 0
    %v562 = vsel %vm71, %v559, 0
    %564 = vmatpush.xpose.msra.mxu0 0.0
    %565 = vmatpush.xpose.msra.mxu0 0.0
    %566 = vmatpush.xpose.msra.mxu0 0.0
    %567 = vmatpush.xpose.msra.mxu0 0.0
    %568 = vmatpush.xpose.msra.mxu0 0.0
    %569 = vmatpush.xpose.msra.mxu0 0.0
    %570 = vmatpush.xpose.msra.mxu0 0.0
    %571 = vmatpush.xpose.msra.mxu0 0.0
    %572 = vmatpush.xpose.msra.mxu0 0.0
    %573 = vmatpush.xpose.msra.mxu0 0.0
    %574 = vmatpush.xpose.msra.mxu0 0.0
    %575 = vmatpush.xpose.msra.mxu0 0.0
    %576 = vmatpush.xpose.msra.mxu0 0.0
    %577 = vmatpush.xpose.msra.mxu0 0.0
    %578 = vmatpush.xpose.msra.mxu0 0.0
    %579 = vmatpush.xpose.msra.mxu0 %v562
    %580 = vmatmul.f32.gmra.mxu0 %v560
    %v581 = vpop.f32.mrf.mxu0
    %v582 = vadd.f32 0.0, %v581
    %583 = vdwg.mxu0
    %584 = vrot.lane.b32.xlu0 %v66, 104
    %v585 = vpop.permute.xlu0 %584
    %586 = vrot.lane.b32.xlu0 %v66, 72
    %v587 = vpop.permute.xlu0 %586
    %v588 = vsel %vm71, %v585, 0
    %v590 = vsel %vm71, %v587, 0
    %592 = vmatpush.xpose.msra.mxu0 0.0
    %593 = vmatpush.xpose.msra.mxu0 0.0
    %594 = vmatpush.xpose.msra.mxu0 0.0
    %595 = vmatpush.xpose.msra.mxu0 0.0
    %596 = vmatpush.xpose.msra.mxu0 0.0
    %597 = vmatpush.xpose.msra.mxu0 0.0
    %598 = vmatpush.xpose.msra.mxu0 0.0
    %599 = vmatpush.xpose.msra.mxu0 0.0
    %600 = vmatpush.xpose.msra.mxu0 0.0
    %601 = vmatpush.xpose.msra.mxu0 0.0
    %602 = vmatpush.xpose.msra.mxu0 0.0
    %603 = vmatpush.xpose.msra.mxu0 0.0
    %604 = vmatpush.xpose.msra.mxu0 0.0
    %605 = vmatpush.xpose.msra.mxu0 0.0
    %606 = vmatpush.xpose.msra.mxu0 0.0
    %607 = vmatpush.xpose.msra.mxu0 %v590
    %608 = vmatmul.f32.gmra.mxu0 %v588
    %v609 = vpop.f32.mrf.mxu0
    %v610 = vadd.f32 0.0, %v609
    %611 = vdwg.mxu0
    %v612 = vsel %vm71, %v582, -inf
    %613 = vmax.xlane.f32.xlu0 %v612
    %v614 = vpop.xlane.xlu0 %613
    %v615 = vsel %vm71, %v610, -inf
    %616 = vmax.xlane.f32.xlu0 %v615
    %v617 = vpop.xlane.xlu0 %616
    %v618 = vsub.f32 %v582, %v614
    %v619 = vsub.f32 %v610, %v617
    %v620 = vmul.f32 %v618, 1.442695
    %v621 = vpow.pop %v620
    %v622 = vmul.f32 %v619, 1.442695
    %v623 = vpow.pop %v622
    %v624 = vsel %vm71, %v621, 0.0
    %625 = vadd.xlane.f32.xlu0 %v624
    %v626 = vpop.xlane.xlu0 %625
    %v627 = vsel %vm71, %v623, 0.0
    %628 = vadd.xlane.f32.xlu0 %v627
    %v629 = vpop.xlane.xlu0 %628
    %v630 = vrcp.pop %v626
    %v631 = vrcp.pop %v629
    %v632 = vmul.f32 %v621, %v630
    %v633 = vmul.f32 %v623, %v631
    %634 = vrot.lane.b32.xlu0 %v63, 40
    %v635 = vpop.permute.xlu0 %634
    %v638 = vsel %vm71, %v632, 0
    %640 = vmatpush.msra.mxu0 0.0
    %641 = vmatpush.msra.mxu0 0.0
    %642 = vmatpush.msra.mxu0 0.0
    %643 = vmatpush.msra.mxu0 0.0
    %644 = vmatpush.msra.mxu0 0.0
    %645 = vmatpush.msra.mxu0 0.0
    %646 = vmatpush.msra.mxu0 0.0
    %647 = vmatpush.msra.mxu0 0.0
    %648 = vmatpush.msra.mxu0 0.0
    %649 = vmatpush.msra.mxu0 0.0
    %650 = vmatpush.msra.mxu0 0.0
    %651 = vmatpush.msra.mxu0 0.0
    %652 = vmatpush.msra.mxu0 0.0
    %653 = vmatpush.msra.mxu0 0.0
    %654 = vmatpush.msra.mxu0 0.0
    %655 = vmatpush.msra.mxu0 %v635
    %656 = vmatmul.f32.gmra.mxu0 %v638
    %v657 = vpop.f32.mrf.mxu0
    %v658 = vadd.f32 0.0, %v657
    %659 = vdwg.mxu0
    %660 = vrot.lane.b32.xlu0 %v66, 40
    %v661 = vpop.permute.xlu0 %660
    %v664 = vsel %vm71, %v633, 0
    %666 = vmatpush.msra.mxu0 0.0
    %667 = vmatpush.msra.mxu0 0.0
    %668 = vmatpush.msra.mxu0 0.0
    %669 = vmatpush.msra.mxu0 0.0
    %670 = vmatpush.msra.mxu0 0.0
    %671 = vmatpush.msra.mxu0 0.0
    %672 = vmatpush.msra.mxu0 0.0
    %673 = vmatpush.msra.mxu0 0.0
    %674 = vmatpush.msra.mxu0 0.0
    %675 = vmatpush.msra.mxu0 0.0
    %676 = vmatpush.msra.mxu0 0.0
    %677 = vmatpush.msra.mxu0 0.0
    %678 = vmatpush.msra.mxu0 0.0
    %679 = vmatpush.msra.mxu0 0.0
    %680 = vmatpush.msra.mxu0 0.0
    %681 = vmatpush.msra.mxu0 %v661
    %682 = vmatmul.f32.gmra.mxu0 %v664
    %v683 = vpop.f32.mrf.mxu0
    %v684 = vadd.f32 0.0, %v683
    %685 = vdwg.mxu0
    %s686 = scalar_lea.vmem %s2, 24
    %v687 = vld [vmem:[%s686] sm:$0xff]
    %v689 = vsel %vm71, %v658, 0
    %v692 = vsel %vm71, %v684, 0
    %694 = vmatpush.msra.mxu0 0.0
    %695 = vmatpush.msra.mxu0 0.0
    %696 = vmatpush.msra.mxu0 0.0
    %697 = vmatpush.msra.mxu0 0.0
    %698 = vmatpush.msra.mxu0 0.0
    %699 = vmatpush.msra.mxu0 0.0
    %700 = vmatpush.msra.mxu0 0.0
    %701 = vmatpush.msra.mxu0 0.0
    %702 = vmatpush.msra.mxu0 0.0
    %703 = vmatpush.msra.mxu0 0.0
    %704 = vmatpush.msra.mxu0 0.0
    %705 = vmatpush.msra.mxu0 0.0
    %706 = vmatpush.msra.mxu0 0.0
    %707 = vmatpush.msra.mxu0 0.0
    %708 = vmatpush.msra.mxu0 0.0
    %709 = vmatpush.msra.mxu0 %v687
    %710 = vmatmul.f32.gmra.mxu0 %v689
    %v711 = vpop.f32.mrf.mxu0
    %v712 = vadd.f32 0.0, %v711
    %713 = vmatmul.f32.gmra.mxu0 %v692
    %v714 = vpop.f32.mrf.mxu0
    %v715 = vadd.f32 0.0, %v714
    %716 = vdwg.mxu0
    %v717 = vadd.f32 %v554, %v712
    %v718 = vadd.f32 %v555, %v715
    %v719 = vadd.f32 %v30, %v717
    %v720 = vadd.f32 %v31, %v718
    %v721 = vsel %vm38, %v719, 0.0
    %722 = vadd.xlane.f32.xlu0 %v721
    %v723 = vpop.xlane.xlu0 %722
    %v724 = vsel %vm38, %v720, 0.0
    %725 = vadd.xlane.f32.xlu0 %v724
    %v726 = vpop.xlane.xlu0 %725
    %v727 = vrcp.pop 32.0
    %v728 = vmul.f32 32.0, %v727
    %v729 = vsub.f32 1.0, %v728
    %v730 = vmul.f32 %v727, %v729
    %v731 = vadd.f32 %v727, %v730
    %vm732 = vweird.f32 %v727
    %v733 = vsel %vm732, %v727, %v731
    %v734 = vmul.f32 %v723, %v733
    %v735 = vmul.f32 %v726, %v733
    %v736 = vmul.f32 %v719, %v719
    %v737 = vmul.f32 %v720, %v720
    %v738 = vsel %vm38, %v736, 0.0
    %739 = vadd.xlane.f32.xlu0 %v738
    %v740 = vpop.xlane.xlu0 %739
    %v741 = vsel %vm38, %v737, 0.0
    %742 = vadd.xlane.f32.xlu0 %v741
    %v743 = vpop.xlane.xlu0 %742
    %v744 = vmul.f32 %v740, %v733
    %v745 = vmul.f32 %v743, %v733
    %v746 = vmul.f32 %v734, %v734
    %v747 = vmul.f32 %v735, %v735
    %v748 = vsub.f32 %v744, %v746
    %v749 = vsub.f32 %v745, %v747
    %v750 = vsub.f32 %v719, %v734
    %v751 = vsub.f32 %v720, %v735
    %v752 = vadd.f32 %v748, 1e-05
    %v753 = vadd.f32 %v749, 1e-05
    %v754 = vrsqrt.pop %v752
    %v755 = vmul.f32 %v754, %v752
    %v756 = vmul.f32 %v755, %v754
    %v757 = vmul.f32 0.5, %v756
    %v758 = vsub.f32 1.5, %v757
    %v759 = vmul.f32 %v754, %v758
    %vm760 = vweird.f32 %v752
    %vm761 = vweird.f32 %v754
    %vm762 = vmor %vm760, %vm761
    %v763 = vsel %vm762, %v754, %v759
    %v764 = vrsqrt.pop %v753
    %v765 = vmul.f32 %v764, %v753
    %v766 = vmul.f32 %v765, %v764
    %v767 = vmul.f32 0.5, %v766
    %v768 = vsub.f32 1.5, %v767
    %v769 = vmul.f32 %v764, %v768
    %vm770 = vweird.f32 %v753
    %vm771 = vweird.f32 %v764
    %vm772 = vmor %vm770, %vm771
    %v773 = vsel %vm772, %v764, %v769
    %v774 = vmul.f32 %v750, %v763
    %v775 = vmul.f32 %v751, %v773
    %v776 = vperm.slane %v32, 2
    %v777 = vmul.f32 %v774, %v776
    %v778 = vmul.f32 %v775, %v776
    %v779 = vperm.slane %v32, 3
    %v780 = vadd.f32 %v777, %v779
    %v781 = vadd.f32 %v778, %v779
    %v782 = vld [vmem:[%s3] sm:$0xff]
    %v783 = vld [vmem:[%s3 + $0x8] sm:$0xff]
    %v784 = vld [vmem:[%s3 + $0x10] sm:$0xff]
    %v785 = vld [vmem:[%s3 + $0x18] sm:$0xff]
    %v786 = vperm.slane %v32, 4
    %v788 = vsel %vm38, %v780, 0
    %v791 = vsel %vm38, %v781, 0
    %793 = vmatpush.msra.mxu0 0.0
    %794 = vmatpush.msra.mxu0 0.0
    %795 = vmatpush.msra.mxu0 0.0
    %796 = vmatpush.msra.mxu0 0.0
    %797 = vmatpush.msra.mxu0 0.0
    %798 = vmatpush.msra.mxu0 0.0
    %799 = vmatpush.msra.mxu0 0.0
    %800 = vmatpush.msra.mxu0 0.0
    %801 = vmatpush.msra.mxu0 0.0
    %802 = vmatpush.msra.mxu0 0.0
    %803 = vmatpush.msra.mxu0 0.0
    %804 = vmatpush.msra.mxu0 0.0
    %805 = vmatpush.msra.mxu0 %v785
    %806 = vmatpush.msra.mxu0 %v784
    %807 = vmatpush.msra.mxu0 %v783
    %808 = vmatpush.msra.mxu0 %v782
    %809 = vmatmul.f32.gmra.mxu0 %v788
    %v810 = vpop.f32.mrf.mxu0
    %v811 = vadd.f32 %v786, %v810
    %812 = vmatmul.f32.gmra.mxu0 %v791
    %v813 = vpop.f32.mrf.mxu0
    %v814 = vadd.f32 %v786, %v813
    %815 = vdwg.mxu0
    %v816 = vmax.f32 %v811, 0.0
    %v817 = vmax.f32 %v814, 0.0
    %v818 = vld [vmem:[%s4] sm:$0xff]
    %v819 = vld [vmem:[%s4 + $0x8] sm:$0xff]
    %v820 = vld [vmem:[%s4 + $0x10] sm:$0xff]
    %v821 = vld [vmem:[%s4 + $0x18] sm:$0xff]
    %v822 = vld [vmem:[%s4 + $0x20] sm:$0xff]
    %v823 = vld [vmem:[%s4 + $0x28] sm:$0xff]
    %v824 = vld [vmem:[%s4 + $0x30] sm:$0xff]
    %v825 = vld [vmem:[%s4 + $0x38] sm:$0xff]
    %v826 = vperm.slane %v32, 5
    %vm827 = vcmask 523264
    %v829 = vsel %vm827, %v816, 0
    %v832 = vsel %vm827, %v817, 0
    %834 = vmatpush.msra.mxu0 0.0
    %835 = vmatpush.msra.mxu0 0.0
    %836 = vmatpush.msra.mxu0 0.0
    %837 = vmatpush.msra.mxu0 0.0
    %838 = vmatpush.msra.mxu0 0.0
    %839 = vmatpush.msra.mxu0 0.0
    %840 = vmatpush.msra.mxu0 0.0
    %841 = vmatpush.msra.mxu0 0.0
    %842 = vmatpush.msra.mxu0 %v825
    %843 = vmatpush.msra.mxu0 %v824
    %844 = vmatpush.msra.mxu0 %v823
    %845 = vmatpush.msra.mxu0 %v822
    %846 = vmatpush.msra.mxu0 %v821
    %847 = vmatpush.msra.mxu0 %v820
    %848 = vmatpush.msra.mxu0 %v819
    %849 = vmatpush.msra.mxu0 %v818
    %850 = vmatmul.f32.gmra.mxu0 %v829
    %v851 = vpop.f32.mrf.mxu0
    %v852 = vadd.f32 %v826, %v851
    %853 = vmatmul.f32.gmra.mxu0 %v832
    %v854 = vpop.f32.mrf.mxu0
    %v855 = vadd.f32 %v826, %v854
    %856 = vdwg.mxu0
    %v857 = vadd.f32 %v780, %v852
    %v858 = vadd.f32 %v781, %v855
    %v859 = vsel %vm38, %v857, 0.0
    %860 = vadd.xlane.f32.xlu0 %v859
    %v861 = vpop.xlane.xlu0 %860
    %v862 = vsel %vm38, %v858, 0.0
    %863 = vadd.xlane.f32.xlu0 %v862
    %v864 = vpop.xlane.xlu0 %863
    %v865 = vmul.f32 %v861, %v733
    %v866 = vmul.f32 %v864, %v733
    %v867 = vmul.f32 %v857, %v857
    %v868 = vmul.f32 %v858, %v858
    %v869 = vsel %vm38, %v867, 0.0
    %870 = vadd.xlane.f32.xlu0 %v869
    %v871 = vpop.xlane.xlu0 %870
    %v872 = vsel %vm38, %v868, 0.0
    %873 = vadd.xlane.f32.xlu0 %v872
    %v874 = vpop.xlane.xlu0 %873
    %v875 = vmul.f32 %v871, %v733
    %v876 = vmul.f32 %v874, %v733
    %v877 = vmul.f32 %v865, %v865
    %v878 = vmul.f32 %v866, %v866
    %v879 = vsub.f32 %v875, %v877
    %v880 = vsub.f32 %v876, %v878
    %v881 = vsub.f32 %v857, %v865
    %v882 = vsub.f32 %v858, %v866
    %v883 = vadd.f32 %v879, 1e-05
    %v884 = vadd.f32 %v880, 1e-05
    %v885 = vrsqrt.pop %v883
    %v886 = vmul.f32 %v885, %v883
    %v887 = vmul.f32 %v886, %v885
    %v888 = vmul.f32 0.5, %v887
    %v889 = vsub.f32 1.5, %v888
    %v890 = vmul.f32 %v885, %v889
    %vm891 = vweird.f32 %v883
    %vm892 = vweird.f32 %v885
    %vm893 = vmor %vm891, %vm892
    %v894 = vsel %vm893, %v885, %v890
    %v895 = vrsqrt.pop %v884
    %v896 = vmul.f32 %v895, %v884
    %v897 = vmul.f32 %v896, %v895
    %v898 = vmul.f32 0.5, %v897
    %v899 = vsub.f32 1.5, %v898
    %v900 = vmul.f32 %v895, %v899
    %vm901 = vweird.f32 %v884
    %vm902 = vweird.f32 %v895
    %vm903 = vmor %vm901, %vm902
    %v904 = vsel %vm903, %v895, %v900
    %v905 = vmul.f32 %v881, %v894
    %v906 = vmul.f32 %v882, %v904
    %v907 = vperm.slane %v32, 6
    %v908 = vmul.f32 %v905, %v907
    %v909 = vmul.f32 %v906, %v907
    %v910 = vperm.slane %v32, 7
    %v911 = vadd.f32 %v908, %v910
    %v912 = vadd.f32 %v909, %v910
    %s913 = scalar_lea.vmem %s5, 8
    %v914 = vld [vmem:[%s913] sm:$0xff]
    %s915 = scalar_lea.vmem %s1, 32
    %v916 = vld [vmem:[%s915] sm:$0xff]
    %v917 = vld [vmem:[%s915 + $0x8] sm:$0xff]
    %v918 = vld [vmem:[%s915 + $0x10] sm:$0xff]
    %v919 = vld [vmem:[%s915 + $0x18] sm:$0xff]
    %v920 = vperm.slane %v914, 0
    %v922 = vsel %vm38, %v911, 0
    %v925 = vsel %vm38, %v912, 0
    %927 = vmatpush.msra.mxu0 0.0
    %928 = vmatpush.msra.mxu0 0.0
    %929 = vmatpush.msra.mxu0 0.0
    %930 = vmatpush.msra.mxu0 0.0
    %931 = vmatpush.msra.mxu0 0.0
    %932 = vmatpush.msra.mxu0 0.0
    %933 = vmatpush.msra.mxu0 0.0
    %934 = vmatpush.msra.mxu0 0.0
    %935 = vmatpush.msra.mxu0 0.0
    %936 = vmatpush.msra.mxu0 0.0
    %937 = vmatpush.msra.mxu0 0.0
    %938 = vmatpush.msra.mxu0 0.0
    %939 = vmatpush.msra.mxu0 %v919
    %940 = vmatpush.msra.mxu0 %v918
    %941 = vmatpush.msra.mxu0 %v917
    %942 = vmatpush.msra.mxu0 %v916
    %943 = vmatmul.f32.gmra.mxu0 %v922
    %v944 = vpop.f32.mrf.mxu0
    %v945 = vadd.f32 %v920, %v944
    %946 = vmatmul.f32.gmra.mxu0 %v925
    %v947 = vpop.f32.mrf.mxu0
    %v948 = vadd.f32 %v920, %v947
    %949 = vdwg.mxu0
    %951 = vrot.lane.b32.xlu0 %v945, 96
    %v952 = vpop.permute.xlu0 %951
    %v953 = vsel %vm71, %v945, 0
    %v955 = vsel %vm71, %v952, 0
    %957 = vmatpush.xpose.msra.mxu0 0.0
    %958 = vmatpush.xpose.msra.mxu0 0.0
    %959 = vmatpush.xpose.msra.mxu0 0.0
    %960 = vmatpush.xpose.msra.mxu0 0.0
    %961 = vmatpush.xpose.msra.mxu0 0.0
    %962 = vmatpush.xpose.msra.mxu0 0.0
    %963 = vmatpush.xpose.msra.mxu0 0.0
    %964 = vmatpush.xpose.msra.mxu0 0.0
    %965 = vmatpush.xpose.msra.mxu0 0.0
    %966 = vmatpush.xpose.msra.mxu0 0.0
    %967 = vmatpush.xpose.msra.mxu0 0.0
    %968 = vmatpush.xpose.msra.mxu0 0.0
    %969 = vmatpush.xpose.msra.mxu0 0.0
    %970 = vmatpush.xpose.msra.mxu0 0.0
    %971 = vmatpush.xpose.msra.mxu0 0.0
    %972 = vmatpush.xpose.msra.mxu0 %v955
    %973 = vmatmul.f32.gmra.mxu0 %v953
    %v974 = vpop.f32.mrf.mxu0
    %v975 = vadd.f32 0.0, %v974
    %976 = vdwg.mxu0
    %978 = vrot.lane.b32.xlu0 %v948, 96
    %v979 = vpop.permute.xlu0 %978
    %v980 = vsel %vm71, %v948, 0
    %v982 = vsel %vm71, %v979, 0
    %984 = vmatpush.xpose.msra.mxu0 0.0
    %985 = vmatpush.xpose.msra.mxu0 0.0
    %986 = vmatpush.xpose.msra.mxu0 0.0
    %987 = vmatpush.xpose.msra.mxu0 0.0
    %988 = vmatpush.xpose.msra.mxu0 0.0
    %989 = vmatpush.xpose.msra.mxu0 0.0
    %990 = vmatpush.xpose.msra.mxu0 0.0
    %991 = vmatpush.xpose.msra.mxu0 0.0
    %992 = vmatpush.xpose.msra.mxu0 0.0
    %993 = vmatpush.xpose.msra.mxu0 0.0
    %994 = vmatpush.xpose.msra.mxu0 0.0
    %995 = vmatpush.xpose.msra.mxu0 0.0
    %996 = vmatpush.xpose.msra.mxu0 0.0
    %997 = vmatpush.xpose.msra.mxu0 0.0
    %998 = vmatpush.xpose.msra.mxu0 0.0
    %999 = vmatpush.xpose.msra.mxu0 %v982
    %1000 = vmatmul.f32.gmra.mxu0 %v980
    %v1001 = vpop.f32.mrf.mxu0
    %v1002 = vadd.f32 0.0, %v1001
    %1003 = vdwg.mxu0
    %v1004 = vsel %vm71, %v975, -inf
    %1005 = vmax.xlane.f32.xlu0 %v1004
    %v1006 = vpop.xlane.xlu0 %1005
    %v1007 = vsel %vm71, %v1002, -inf
    %1008 = vmax.xlane.f32.xlu0 %v1007
    %v1009 = vpop.xlane.xlu0 %1008
    %v1010 = vsub.f32 %v975, %v1006
    %v1011 = vsub.f32 %v1002, %v1009
    %v1012 = vmul.f32 %v1010, 1.442695
    %v1013 = vpow.pop %v1012
    %v1014 = vmul.f32 %v1011, 1.442695
    %v1015 = vpow.pop %v1014
    %v1016 = vsel %vm71, %v1013, 0.0
    %1017 = vadd.xlane.f32.xlu0 %v1016
    %v1018 = vpop.xlane.xlu0 %1017
    %v1019 = vsel %vm71, %v1015, 0.0
    %1020 = vadd.xlane.f32.xlu0 %v1019
    %v1021 = vpop.xlane.xlu0 %1020
    %v1022 = vrcp.pop %v1018
    %v1023 = vrcp.pop %v1021
    %v1024 = vmul.f32 %v1013, %v1022
    %v1025 = vmul.f32 %v1015, %v1023
    %1026 = vrot.lane.b32.xlu0 %v945, 64
    %v1027 = vpop.permute.xlu0 %1026
    %v1030 = vsel %vm71, %v1024, 0
    %1032 = vmatpush.msra.mxu0 0.0
    %1033 = vmatpush.msra.mxu0 0.0
    %1034 = vmatpush.msra.mxu0 0.0
    %1035 = vmatpush.msra.mxu0 0.0
    %1036 = vmatpush.msra.mxu0 0.0
    %1037 = vmatpush.msra.mxu0 0.0
    %1038 = vmatpush.msra.mxu0 0.0
    %1039 = vmatpush.msra.mxu0 0.0
    %1040 = vmatpush.msra.mxu0 0.0
    %1041 = vmatpush.msra.mxu0 0.0
    %1042 = vmatpush.msra.mxu0 0.0
    %1043 = vmatpush.msra.mxu0 0.0
    %1044 = vmatpush.msra.mxu0 0.0
    %1045 = vmatpush.msra.mxu0 0.0
    %1046 = vmatpush.msra.mxu0 0.0
    %1047 = vmatpush.msra.mxu0 %v1027
    %1048 = vmatmul.f32.gmra.mxu0 %v1030
    %v1049 = vpop.f32.mrf.mxu0
    %v1050 = vadd.f32 0.0, %v1049
    %1051 = vdwg.mxu0
    %1052 = vrot.lane.b32.xlu0 %v948, 64
    %v1053 = vpop.permute.xlu0 %1052
    %v1056 = vsel %vm71, %v1025, 0
    %1058 = vmatpush.msra.mxu0 0.0
    %1059 = vmatpush.msra.mxu0 0.0
    %1060 = vmatpush.msra.mxu0 0.0
    %1061 = vmatpush.msra.mxu0 0.0
    %1062 = vmatpush.msra.mxu0 0.0
    %1063 = vmatpush.msra.mxu0 0.0
    %1064 = vmatpush.msra.mxu0 0.0
    %1065 = vmatpush.msra.mxu0 0.0
    %1066 = vmatpush.msra.mxu0 0.0
    %1067 = vmatpush.msra.mxu0 0.0
    %1068 = vmatpush.msra.mxu0 0.0
    %1069 = vmatpush.msra.mxu0 0.0
    %1070 = vmatpush.msra.mxu0 0.0
    %1071 = vmatpush.msra.mxu0 0.0
    %1072 = vmatpush.msra.mxu0 0.0
    %1073 = vmatpush.msra.mxu0 %v1053
    %1074 = vmatmul.f32.gmra.mxu0 %v1056
    %v1075 = vpop.f32.mrf.mxu0
    %v1076 = vadd.f32 0.0, %v1075
    %1077 = vdwg.mxu0
    %s1078 = scalar_lea.vmem %s2, 32
    %v1079 = vld [vmem:[%s1078] sm:$0xff]
    %v1081 = vsel %vm71, %v1050, 0
    %v1084 = vsel %vm71, %v1076, 0
    %1086 = vmatpush.msra.mxu0 0.0
    %1087 = vmatpush.msra.mxu0 0.0
    %1088 = vmatpush.msra.mxu0 0.0
    %1089 = vmatpush.msra.mxu0 0.0
    %1090 = vmatpush.msra.mxu0 0.0
    %1091 = vmatpush.msra.mxu0 0.0
    %1092 = vmatpush.msra.mxu0 0.0
    %1093 = vmatpush.msra.mxu0 0.0
    %1094 = vmatpush.msra.mxu0 0.0
    %1095 = vmatpush.msra.mxu0 0.0
    %1096 = vmatpush.msra.mxu0 0.0
    %1097 = vmatpush.msra.mxu0 0.0
    %1098 = vmatpush.msra.mxu0 0.0
    %1099 = vmatpush.msra.mxu0 0.0
    %1100 = vmatpush.msra.mxu0 0.0
    %1101 = vmatpush.msra.mxu0 %v1079
    %1102 = vmatmul.f32.gmra.mxu0 %v1081
    %v1103 = vpop.f32.mrf.mxu0
    %v1104 = vadd.f32 0.0, %v1103
    %1105 = vmatmul.f32.gmra.mxu0 %v1084
    %v1106 = vpop.f32.mrf.mxu0
    %v1107 = vadd.f32 0.0, %v1106
    %1108 = vdwg.mxu0
    %v1109 = vperm.slane %v914, 1
    %v1110 = vadd.f32 %v1109, %v1104
    %v1111 = vadd.f32 %v1109, %v1107
    %1112 = vrot.lane.b32.xlu0 %v945, 120
    %v1113 = vpop.permute.xlu0 %1112
    %1114 = vrot.lane.b32.xlu0 %v945, 88
    %v1115 = vpop.permute.xlu0 %1114
    %v1116 = vsel %vm71, %v1113, 0
    %v1118 = vsel %vm71, %v1115, 0
    %1120 = vmatpush.xpose.msra.mxu0 0.0
    %1121 = vmatpush.xpose.msra.mxu0 0.0
    %1122 = vmatpush.xpose.msra.mxu0 0.0
    %1123 = vmatpush.xpose.msra.mxu0 0.0
    %1124 = vmatpush.xpose.msra.mxu0 0.0
    %1125 = vmatpush.xpose.msra.mxu0 0.0
    %1126 = vmatpush.xpose.msra.mxu0 0.0
    %1127 = vmatpush.xpose.msra.mxu0 0.0
    %1128 = vmatpush.xpose.msra.mxu0 0.0
    %1129 = vmatpush.xpose.msra.mxu0 0.0
    %1130 = vmatpush.xpose.msra.mxu0 0.0
    %1131 = vmatpush.xpose.msra.mxu0 0.0
    %1132 = vmatpush.xpose.msra.mxu0 0.0
    %1133 = vmatpush.xpose.msra.mxu0 0.0
    %1134 = vmatpush.xpose.msra.mxu0 0.0
    %1135 = vmatpush.xpose.msra.mxu0 %v1118
    %1136 = vmatmul.f32.gmra.mxu0 %v1116
    %v1137 = vpop.f32.mrf.mxu0
    %v1138 = vadd.f32 0.0, %v1137
    %1139 = vdwg.mxu0
    %1140 = vrot.lane.b32.xlu0 %v948, 120
    %v1141 = vpop.permute.xlu0 %1140
    %1142 = vrot.lane.b32.xlu0 %v948, 88
    %v1143 = vpop.permute.xlu0 %1142
    %v1144 = vsel %vm71, %v1141, 0
    %v1146 = vsel %vm71, %v1143, 0
    %1148 = vmatpush.xpose.msra.mxu0 0.0
    %1149 = vmatpush.xpose.msra.mxu0 0.0
    %1150 = vmatpush.xpose.msra.mxu0 0.0
    %1151 = vmatpush.xpose.msra.mxu0 0.0
    %1152 = vmatpush.xpose.msra.mxu0 0.0
    %1153 = vmatpush.xpose.msra.mxu0 0.0
    %1154 = vmatpush.xpose.msra.mxu0 0.0
    %1155 = vmatpush.xpose.msra.mxu0 0.0
    %1156 = vmatpush.xpose.msra.mxu0 0.0
    %1157 = vmatpush.xpose.msra.mxu0 0.0
    %1158 = vmatpush.xpose.msra.mxu0 0.0
    %1159 = vmatpush.xpose.msra.mxu0 0.0
    %1160 = vmatpush.xpose.msra.mxu0 0.0
    %1161 = vmatpush.xpose.msra.mxu0 0.0
    %1162 = vmatpush.xpose.msra.mxu0 0.0
    %1163 = vmatpush.xpose.msra.mxu0 %v1146
    %1164 = vmatmul.f32.gmra.mxu0 %v1144
    %v1165 = vpop.f32.mrf.mxu0
    %v1166 = vadd.f32 0.0, %v1165
    %1167 = vdwg.mxu0
    %v1168 = vsel %vm71, %v1138, -inf
    %1169 = vmax.xlane.f32.xlu0 %v1168
    %v1170 = vpop.xlane.xlu0 %1169
    %v1171 = vsel %vm71, %v1166, -inf
    %1172 = vmax.xlane.f32.xlu0 %v1171
    %v1173 = vpop.xlane.xlu0 %1172
    %v1174 = vsub.f32 %v1138, %v1170
    %v1175 = vsub.f32 %v1166, %v1173
    %v1176 = vmul.f32 %v1174, 1.442695
    %v1177 = vpow.pop %v1176
    %v1178 = vmul.f32 %v1175, 1.442695
    %v1179 = vpow.pop %v1178
    %v1180 = vsel %vm71, %v1177, 0.0
    %1181 = vadd.xlane.f32.xlu0 %v1180
    %v1182 = vpop.xlane.xlu0 %1181
    %v1183 = vsel %vm71, %v1179, 0.0
    %1184 = vadd.xlane.f32.xlu0 %v1183
    %v1185 = vpop.xlane.xlu0 %1184
    %v1186 = vrcp.pop %v1182
    %v1187 = vrcp.pop %v1185
    %v1188 = vmul.f32 %v1177, %v1186
    %v1189 = vmul.f32 %v1179, %v1187
    %1190 = vrot.lane.b32.xlu0 %v945, 56
    %v1191 = vpop.permute.xlu0 %1190
    %v1194 = vsel %vm71, %v1188, 0
    %1196 = vmatpush.msra.mxu0 0.0
    %1197 = vmatpush.msra.mxu0 0.0
    %1198 = vmatpush.msra.mxu0 0.0
    %1199 = vmatpush.msra.mxu0 0.0
    %1200 = vmatpush.msra.mxu0 0.0
    %1201 = vmatpush.msra.mxu0 0.0
    %1202 = vmatpush.msra.mxu0 0.0
    %1203 = vmatpush.msra.mxu0 0.0
    %1204 = vmatpush.msra.mxu0 0.0
    %1205 = vmatpush.msra.mxu0 0.0
    %1206 = vmatpush.msra.mxu0 0.0
    %1207 = vmatpush.msra.mxu0 0.0
    %1208 = vmatpush.msra.mxu0 0.0
    %1209 = vmatpush.msra.mxu0 0.0
    %1210 = vmatpush.msra.mxu0 0.0
    %1211 = vmatpush.msra.mxu0 %v1191
    %1212 = vmatmul.f32.gmra.mxu0 %v1194
    %v1213 = vpop.f32.mrf.mxu0
    %v1214 = vadd.f32 0.0, %v1213
    %1215 = vdwg.mxu0
    %1216 = vrot.lane.b32.xlu0 %v948, 56
    %v1217 = vpop.permute.xlu0 %1216
    %v1220 = vsel %vm71, %v1189, 0
    %1222 = vmatpush.msra.mxu0 0.0
    %1223 = vmatpush.msra.mxu0 0.0
    %1224 = vmatpush.msra.mxu0 0.0
    %1225 = vmatpush.msra.mxu0 0.0
    %1226 = vmatpush.msra.mxu0 0.0
    %1227 = vmatpush.msra.mxu0 0.0
    %1228 = vmatpush.msra.mxu0 0.0
    %1229 = vmatpush.msra.mxu0 0.0
    %1230 = vmatpush.msra.mxu0 0.0
    %1231 = vmatpush.msra.mxu0 0.0
    %1232 = vmatpush.msra.mxu0 0.0
    %1233 = vmatpush.msra.mxu0 0.0
    %1234 = vmatpush.msra.mxu0 0.0
    %1235 = vmatpush.msra.mxu0 0.0
    %1236 = vmatpush.msra.mxu0 0.0
    %1237 = vmatpush.msra.mxu0 %v1217
    %1238 = vmatmul.f32.gmra.mxu0 %v1220
    %v1239 = vpop.f32.mrf.mxu0
    %v1240 = vadd.f32 0.0, %v1239
    %1241 = vdwg.mxu0
    %s1242 = scalar_lea.vmem %s2, 40
    %v1243 = vld [vmem:[%s1242] sm:$0xff]
    %v1245 = vsel %vm71, %v1214, 0
    %v1248 = vsel %vm71, %v1240, 0
    %1250 = vmatpush.msra.mxu0 0.0
    %1251 = vmatpush.msra.mxu0 0.0
    %1252 = vmatpush.msra.mxu0 0.0
    %1253 = vmatpush.msra.mxu0 0.0
    %1254 = vmatpush.msra.mxu0 0.0
    %1255 = vmatpush.msra.mxu0 0.0
    %1256 = vmatpush.msra.mxu0 0.0
    %1257 = vmatpush.msra.mxu0 0.0
    %1258 = vmatpush.msra.mxu0 0.0
    %1259 = vmatpush.msra.mxu0 0.0
    %1260 = vmatpush.msra.mxu0 0.0
    %1261 = vmatpush.msra.mxu0 0.0
    %1262 = vmatpush.msra.mxu0 0.0
    %1263 = vmatpush.msra.mxu0 0.0
    %1264 = vmatpush.msra.mxu0 0.0
    %1265 = vmatpush.msra.mxu0 %v1243
    %1266 = vmatmul.f32.gmra.mxu0 %v1245
    %v1267 = vpop.f32.mrf.mxu0
    %v1268 = vadd.f32 0.0, %v1267
    %1269 = vmatmul.f32.gmra.mxu0 %v1248
    %v1270 = vpop.f32.mrf.mxu0
    %v1271 = vadd.f32 0.0, %v1270
    %1272 = vdwg.mxu0
    %v1273 = vadd.f32 %v1110, %v1268
    %v1274 = vadd.f32 %v1111, %v1271
    %1275 = vrot.lane.b32.xlu0 %v945, 112
    %v1276 = vpop.permute.xlu0 %1275
    %1277 = vrot.lane.b32.xlu0 %v945, 80
    %v1278 = vpop.permute.xlu0 %1277
    %v1279 = vsel %vm71, %v1276, 0
    %v1281 = vsel %vm71, %v1278, 0
    %1283 = vmatpush.xpose.msra.mxu0 0.0
    %1284 = vmatpush.xpose.msra.mxu0 0.0
    %1285 = vmatpush.xpose.msra.mxu0 0.0
    %1286 = vmatpush.xpose.msra.mxu0 0.0
    %1287 = vmatpush.xpose.msra.mxu0 0.0
    %1288 = vmatpush.xpose.msra.mxu0 0.0
    %1289 = vmatpush.xpose.msra.mxu0 0.0
    %1290 = vmatpush.xpose.msra.mxu0 0.0
    %1291 = vmatpush.xpose.msra.mxu0 0.0
    %1292 = vmatpush.xpose.msra.mxu0 0.0
    %1293 = vmatpush.xpose.msra.mxu0 0.0
    %1294 = vmatpush.xpose.msra.mxu0 0.0
    %1295 = vmatpush.xpose.msra.mxu0 0.0
    %1296 = vmatpush.xpose.msra.mxu0 0.0
    %1297 = vmatpush.xpose.msra.mxu0 0.0
    %1298 = vmatpush.xpose.msra.mxu0 %v1281
    %1299 = vmatmul.f32.gmra.mxu0 %v1279
    %v1300 = vpop.f32.mrf.mxu0
    %v1301 = vadd.f32 0.0, %v1300
    %1302 = vdwg.mxu0
    %1303 = vrot.lane.b32.xlu0 %v948, 112
    %v1304 = vpop.permute.xlu0 %1303
    %1305 = vrot.lane.b32.xlu0 %v948, 80
    %v1306 = vpop.permute.xlu0 %1305
    %v1307 = vsel %vm71, %v1304, 0
    %v1309 = vsel %vm71, %v1306, 0
    %1311 = vmatpush.xpose.msra.mxu0 0.0
    %1312 = vmatpush.xpose.msra.mxu0 0.0
    %1313 = vmatpush.xpose.msra.mxu0 0.0
    %1314 = vmatpush.xpose.msra.mxu0 0.0
    %1315 = vmatpush.xpose.msra.mxu0 0.0
    %1316 = vmatpush.xpose.msra.mxu0 0.0
    %1317 = vmatpush.xpose.msra.mxu0 0.0
    %1318 = vmatpush.xpose.msra.mxu0 0.0
    %1319 = vmatpush.xpose.msra.mxu0 0.0
    %1320 = vmatpush.xpose.msra.mxu0 0.0
    %1321 = vmatpush.xpose.msra.mxu0 0.0
    %1322 = vmatpush.xpose.msra.mxu0 0.0
    %1323 = vmatpush.xpose.msra.mxu0 0.0
    %1324 = vmatpush.xpose.msra.mxu0 0.0
    %1325 = vmatpush.xpose.msra.mxu0 0.0
    %1326 = vmatpush.xpose.msra.mxu0 %v1309
    %1327 = vmatmul.f32.gmra.mxu0 %v1307
    %v1328 = vpop.f32.mrf.mxu0
    %v1329 = vadd.f32 0.0, %v1328
    %1330 = vdwg.mxu0
    %v1331 = vsel %vm71, %v1301, -inf
    %1332 = vmax.xlane.f32.xlu0 %v1331
    %v1333 = vpop.xlane.xlu0 %1332
    %v1334 = vsel %vm71, %v1329, -inf
    %1335 = vmax.xlane.f32.xlu0 %v1334
    %v1336 = vpop.xlane.xlu0 %1335
    %v1337 = vsub.f32 %v1301, %v1333
    %v1338 = vsub.f32 %v1329, %v1336
    %v1339 = vmul.f32 %v1337, 1.442695
    %v1340 = vpow.pop %v1339
    %v1341 = vmul.f32 %v1338, 1.442695
    %v1342 = vpow.pop %v1341
    %v1343 = vsel %vm71, %v1340, 0.0
    %1344 = vadd.xlane.f32.xlu0 %v1343
    %v1345 = vpop.xlane.xlu0 %1344
    %v1346 = vsel %vm71, %v1342, 0.0
    %1347 = vadd.xlane.f32.xlu0 %v1346
    %v1348 = vpop.xlane.xlu0 %1347
    %v1349 = vrcp.pop %v1345
    %v1350 = vrcp.pop %v1348
    %v1351 = vmul.f32 %v1340, %v1349
    %v1352 = vmul.f32 %v1342, %v1350
    %1353 = vrot.lane.b32.xlu0 %v945, 48
    %v1354 = vpop.permute.xlu0 %1353
    %v1357 = vsel %vm71, %v1351, 0
    %1359 = vmatpush.msra.mxu0 0.0
    %1360 = vmatpush.msra.mxu0 0.0
    %1361 = vmatpush.msra.mxu0 0.0
    %1362 = vmatpush.msra.mxu0 0.0
    %1363 = vmatpush.msra.mxu0 0.0
    %1364 = vmatpush.msra.mxu0 0.0
    %1365 = vmatpush.msra.mxu0 0.0
    %1366 = vmatpush.msra.mxu0 0.0
    %1367 = vmatpush.msra.mxu0 0.0
    %1368 = vmatpush.msra.mxu0 0.0
    %1369 = vmatpush.msra.mxu0 0.0
    %1370 = vmatpush.msra.mxu0 0.0
    %1371 = vmatpush.msra.mxu0 0.0
    %1372 = vmatpush.msra.mxu0 0.0
    %1373 = vmatpush.msra.mxu0 0.0
    %1374 = vmatpush.msra.mxu0 %v1354
    %1375 = vmatmul.f32.gmra.mxu0 %v1357
    %v1376 = vpop.f32.mrf.mxu0
    %v1377 = vadd.f32 0.0, %v1376
    %1378 = vdwg.mxu0
    %1379 = vrot.lane.b32.xlu0 %v948, 48
    %v1380 = vpop.permute.xlu0 %1379
    %v1383 = vsel %vm71, %v1352, 0
    %1385 = vmatpush.msra.mxu0 0.0
    %1386 = vmatpush.msra.mxu0 0.0
    %1387 = vmatpush.msra.mxu0 0.0
    %1388 = vmatpush.msra.mxu0 0.0
    %1389 = vmatpush.msra.mxu0 0.0
    %1390 = vmatpush.msra.mxu0 0.0
    %1391 = vmatpush.msra.mxu0 0.0
    %1392 = vmatpush.msra.mxu0 0.0
    %1393 = vmatpush.msra.mxu0 0.0
    %1394 = vmatpush.msra.mxu0 0.0
    %1395 = vmatpush.msra.mxu0 0.0
    %1396 = vmatpush.msra.mxu0 0.0
    %1397 = vmatpush.msra.mxu0 0.0
    %1398 = vmatpush.msra.mxu0 0.0
    %1399 = vmatpush.msra.mxu0 0.0
    %1400 = vmatpush.msra.mxu0 %v1380
    %1401 = vmatmul.f32.gmra.mxu0 %v1383
    %v1402 = vpop.f32.mrf.mxu0
    %v1403 = vadd.f32 0.0, %v1402
    %1404 = vdwg.mxu0
    %s1405 = scalar_lea.vmem %s2, 48
    %v1406 = vld [vmem:[%s1405] sm:$0xff]
    %v1408 = vsel %vm71, %v1377, 0
    %v1411 = vsel %vm71, %v1403, 0
    %1413 = vmatpush.msra.mxu0 0.0
    %1414 = vmatpush.msra.mxu0 0.0
    %1415 = vmatpush.msra.mxu0 0.0
    %1416 = vmatpush.msra.mxu0 0.0
    %1417 = vmatpush.msra.mxu0 0.0
    %1418 = vmatpush.msra.mxu0 0.0
    %1419 = vmatpush.msra.mxu0 0.0
    %1420 = vmatpush.msra.mxu0 0.0
    %1421 = vmatpush.msra.mxu0 0.0
    %1422 = vmatpush.msra.mxu0 0.0
    %1423 = vmatpush.msra.mxu0 0.0
    %1424 = vmatpush.msra.mxu0 0.0
    %1425 = vmatpush.msra.mxu0 0.0
    %1426 = vmatpush.msra.mxu0 0.0
    %1427 = vmatpush.msra.mxu0 0.0
    %1428 = vmatpush.msra.mxu0 %v1406
    %1429 = vmatmul.f32.gmra.mxu0 %v1408
    %v1430 = vpop.f32.mrf.mxu0
    %v1431 = vadd.f32 0.0, %v1430
    %1432 = vmatmul.f32.gmra.mxu0 %v1411
    %v1433 = vpop.f32.mrf.mxu0
    %v1434 = vadd.f32 0.0, %v1433
    %1435 = vdwg.mxu0
    %v1436 = vadd.f32 %v1273, %v1431
    %v1437 = vadd.f32 %v1274, %v1434
    %1438 = vrot.lane.b32.xlu0 %v945, 104
    %v1439 = vpop.permute.xlu0 %1438
    %1440 = vrot.lane.b32.xlu0 %v945, 72
    %v1441 = vpop.permute.xlu0 %1440
    %v1442 = vsel %vm71, %v1439, 0
    %v1444 = vsel %vm71, %v1441, 0
    %1446 = vmatpush.xpose.msra.mxu0 0.0
    %1447 = vmatpush.xpose.msra.mxu0 0.0
    %1448 = vmatpush.xpose.msra.mxu0 0.0
    %1449 = vmatpush.xpose.msra.mxu0 0.0
    %1450 = vmatpush.xpose.msra.mxu0 0.0
    %1451 = vmatpush.xpose.msra.mxu0 0.0
    %1452 = vmatpush.xpose.msra.mxu0 0.0
    %1453 = vmatpush.xpose.msra.mxu0 0.0
    %1454 = vmatpush.xpose.msra.mxu0 0.0
    %1455 = vmatpush.xpose.msra.mxu0 0.0
    %1456 = vmatpush.xpose.msra.mxu0 0.0
    %1457 = vmatpush.xpose.msra.mxu0 0.0
    %1458 = vmatpush.xpose.msra.mxu0 0.0
    %1459 = vmatpush.xpose.msra.mxu0 0.0
    %1460 = vmatpush.xpose.msra.mxu0 0.0
    %1461 = vmatpush.xpose.msra.mxu0 %v1444
    %1462 = vmatmul.f32.gmra.mxu0 %v1442
    %v1463 = vpop.f32.mrf.mxu0
    %v1464 = vadd.f32 0.0, %v1463
    %1465 = vdwg.mxu0
    %1466 = vrot.lane.b32.xlu0 %v948, 104
    %v1467 = vpop.permute.xlu0 %1466
    %1468 = vrot.lane.b32.xlu0 %v948, 72
    %v1469 = vpop.permute.xlu0 %1468
    %v1470 = vsel %vm71, %v1467, 0
    %v1472 = vsel %vm71, %v1469, 0
    %1474 = vmatpush.xpose.msra.mxu0 0.0
    %1475 = vmatpush.xpose.msra.mxu0 0.0
    %1476 = vmatpush.xpose.msra.mxu0 0.0
    %1477 = vmatpush.xpose.msra.mxu0 0.0
    %1478 = vmatpush.xpose.msra.mxu0 0.0
    %1479 = vmatpush.xpose.msra.mxu0 0.0
    %1480 = vmatpush.xpose.msra.mxu0 0.0
    %1481 = vmatpush.xpose.msra.mxu0 0.0
    %1482 = vmatpush.xpose.msra.mxu0 0.0
    %1483 = vmatpush.xpose.msra.mxu0 0.0
    %1484 = vmatpush.xpose.msra.mxu0 0.0
    %1485 = vmatpush.xpose.msra.mxu0 0.0
    %1486 = vmatpush.xpose.msra.mxu0 0.0
    %1487 = vmatpush.xpose.msra.mxu0 0.0
    %1488 = vmatpush.xpose.msra.mxu0 0.0
    %1489 = vmatpush.xpose.msra.mxu0 %v1472
    %1490 = vmatmul.f32.gmra.mxu0 %v1470
    %v1491 = vpop.f32.mrf.mxu0
    %v1492 = vadd.f32 0.0, %v1491
    %1493 = vdwg.mxu0
    %v1494 = vsel %vm71, %v1464, -inf
    %1495 = vmax.xlane.f32.xlu0 %v1494
    %v1496 = vpop.xlane.xlu0 %1495
    %v1497 = vsel %vm71, %v1492, -inf
    %1498 = vmax.xlane.f32.xlu0 %v1497
    %v1499 = vpop.xlane.xlu0 %1498
    %v1500 = vsub.f32 %v1464, %v1496
    %v1501 = vsub.f32 %v1492, %v1499
    %v1502 = vmul.f32 %v1500, 1.442695
    %v1503 = vpow.pop %v1502
    %v1504 = vmul.f32 %v1501, 1.442695
    %v1505 = vpow.pop %v1504
    %v1506 = vsel %vm71, %v1503, 0.0
    %1507 = vadd.xlane.f32.xlu0 %v1506
    %v1508 = vpop.xlane.xlu0 %1507
    %v1509 = vsel %vm71, %v1505, 0.0
    %1510 = vadd.xlane.f32.xlu0 %v1509
    %v1511 = vpop.xlane.xlu0 %1510
    %v1512 = vrcp.pop %v1508
    %v1513 = vrcp.pop %v1511
    %v1514 = vmul.f32 %v1503, %v1512
    %v1515 = vmul.f32 %v1505, %v1513
    %1516 = vrot.lane.b32.xlu0 %v945, 40
    %v1517 = vpop.permute.xlu0 %1516
    %v1520 = vsel %vm71, %v1514, 0
    %1522 = vmatpush.msra.mxu0 0.0
    %1523 = vmatpush.msra.mxu0 0.0
    %1524 = vmatpush.msra.mxu0 0.0
    %1525 = vmatpush.msra.mxu0 0.0
    %1526 = vmatpush.msra.mxu0 0.0
    %1527 = vmatpush.msra.mxu0 0.0
    %1528 = vmatpush.msra.mxu0 0.0
    %1529 = vmatpush.msra.mxu0 0.0
    %1530 = vmatpush.msra.mxu0 0.0
    %1531 = vmatpush.msra.mxu0 0.0
    %1532 = vmatpush.msra.mxu0 0.0
    %1533 = vmatpush.msra.mxu0 0.0
    %1534 = vmatpush.msra.mxu0 0.0
    %1535 = vmatpush.msra.mxu0 0.0
    %1536 = vmatpush.msra.mxu0 0.0
    %1537 = vmatpush.msra.mxu0 %v1517
    %1538 = vmatmul.f32.gmra.mxu0 %v1520
    %v1539 = vpop.f32.mrf.mxu0
    %v1540 = vadd.f32 0.0, %v1539
    %1541 = vdwg.mxu0
    %1542 = vrot.lane.b32.xlu0 %v948, 40
    %v1543 = vpop.permute.xlu0 %1542
    %v1546 = vsel %vm71, %v1515, 0
    %1548 = vmatpush.msra.mxu0 0.0
    %1549 = vmatpush.msra.mxu0 0.0
    %1550 = vmatpush.msra.mxu0 0.0
    %1551 = vmatpush.msra.mxu0 0.0
    %1552 = vmatpush.msra.mxu0 0.0
    %1553 = vmatpush.msra.mxu0 0.0
    %1554 = vmatpush.msra.mxu0 0.0
    %1555 = vmatpush.msra.mxu0 0.0
    %1556 = vmatpush.msra.mxu0 0.0
    %1557 = vmatpush.msra.mxu0 0.0
    %1558 = vmatpush.msra.mxu0 0.0
    %1559 = vmatpush.msra.mxu0 0.0
    %1560 = vmatpush.msra.mxu0 0.0
    %1561 = vmatpush.msra.mxu0 0.0
    %1562 = vmatpush.msra.mxu0 0.0
    %1563 = vmatpush.msra.mxu0 %v1543
    %1564 = vmatmul.f32.gmra.mxu0 %v1546
    %v1565 = vpop.f32.mrf.mxu0
    %v1566 = vadd.f32 0.0, %v1565
    %1567 = vdwg.mxu0
    %s1568 = scalar_lea.vmem %s2, 56
    %v1569 = vld [vmem:[%s1568] sm:$0xff]
    %v1571 = vsel %vm71, %v1540, 0
    %v1574 = vsel %vm71, %v1566, 0
    %1576 = vmatpush.msra.mxu0 0.0
    %1577 = vmatpush.msra.mxu0 0.0
    %1578 = vmatpush.msra.mxu0 0.0
    %1579 = vmatpush.msra.mxu0 0.0
    %1580 = vmatpush.msra.mxu0 0.0
    %1581 = vmatpush.msra.mxu0 0.0
    %1582 = vmatpush.msra.mxu0 0.0
    %1583 = vmatpush.msra.mxu0 0.0
    %1584 = vmatpush.msra.mxu0 0.0
    %1585 = vmatpush.msra.mxu0 0.0
    %1586 = vmatpush.msra.mxu0 0.0
    %1587 = vmatpush.msra.mxu0 0.0
    %1588 = vmatpush.msra.mxu0 0.0
    %1589 = vmatpush.msra.mxu0 0.0
    %1590 = vmatpush.msra.mxu0 0.0
    %1591 = vmatpush.msra.mxu0 %v1569
    %1592 = vmatmul.f32.gmra.mxu0 %v1571
    %v1593 = vpop.f32.mrf.mxu0
    %v1594 = vadd.f32 0.0, %v1593
    %1595 = vmatmul.f32.gmra.mxu0 %v1574
    %v1596 = vpop.f32.mrf.mxu0
    %v1597 = vadd.f32 0.0, %v1596
    %1598 = vdwg.mxu0
    %v1599 = vadd.f32 %v1436, %v1594
    %v1600 = vadd.f32 %v1437, %v1597
    %v1601 = vadd.f32 %v911, %v1599
    %v1602 = vadd.f32 %v912, %v1600
    %v1603 = vsel %vm38, %v1601, 0.0
    %1604 = vadd.xlane.f32.xlu0 %v1603
    %v1605 = vpop.xlane.xlu0 %1604
    %v1606 = vsel %vm38, %v1602, 0.0
    %1607 = vadd.xlane.f32.xlu0 %v1606
    %v1608 = vpop.xlane.xlu0 %1607
    %v1609 = vmul.f32 %v1605, %v733
    %v1610 = vmul.f32 %v1608, %v733
    %v1611 = vmul.f32 %v1601, %v1601
    %v1612 = vmul.f32 %v1602, %v1602
    %v1613 = vsel %vm38, %v1611, 0.0
    %1614 = vadd.xlane.f32.xlu0 %v1613
    %v1615 = vpop.xlane.xlu0 %1614
    %v1616 = vsel %vm38, %v1612, 0.0
    %1617 = vadd.xlane.f32.xlu0 %v1616
    %v1618 = vpop.xlane.xlu0 %1617
    %v1619 = vmul.f32 %v1615, %v733
    %v1620 = vmul.f32 %v1618, %v733
    %v1621 = vmul.f32 %v1609, %v1609
    %v1622 = vmul.f32 %v1610, %v1610
    %v1623 = vsub.f32 %v1619, %v1621
    %v1624 = vsub.f32 %v1620, %v1622
    %v1625 = vsub.f32 %v1601, %v1609
    %v1626 = vsub.f32 %v1602, %v1610
    %v1627 = vadd.f32 %v1623, 1e-05
    %v1628 = vadd.f32 %v1624, 1e-05
    %v1629 = vrsqrt.pop %v1627
    %v1630 = vmul.f32 %v1629, %v1627
    %v1631 = vmul.f32 %v1630, %v1629
    %v1632 = vmul.f32 0.5, %v1631
    %v1633 = vsub.f32 1.5, %v1632
    %v1634 = vmul.f32 %v1629, %v1633
    %vm1635 = vweird.f32 %v1627
    %vm1636 = vweird.f32 %v1629
    %vm1637 = vmor %vm1635, %vm1636
    %v1638 = vsel %vm1637, %v1629, %v1634
    %v1639 = vrsqrt.pop %v1628
    %v1640 = vmul.f32 %v1639, %v1628
    %v1641 = vmul.f32 %v1640, %v1639
    %v1642 = vmul.f32 0.5, %v1641
    %v1643 = vsub.f32 1.5, %v1642
    %v1644 = vmul.f32 %v1639, %v1643
    %vm1645 = vweird.f32 %v1628
    %vm1646 = vweird.f32 %v1639
    %vm1647 = vmor %vm1645, %vm1646
    %v1648 = vsel %vm1647, %v1639, %v1644
    %v1649 = vmul.f32 %v1625, %v1638
    %v1650 = vmul.f32 %v1626, %v1648
    %v1651 = vperm.slane %v914, 2
    %v1652 = vmul.f32 %v1649, %v1651
    %v1653 = vmul.f32 %v1650, %v1651
    %v1654 = vperm.slane %v914, 3
    %v1655 = vadd.f32 %v1652, %v1654
    %v1656 = vadd.f32 %v1653, %v1654
    %s1657 = scalar_lea.vmem %s3, 32
    %v1658 = vld [vmem:[%s1657] sm:$0xff]
    %v1659 = vld [vmem:[%s1657 + $0x8] sm:$0xff]
    %v1660 = vld [vmem:[%s1657 + $0x10] sm:$0xff]
    %v1661 = vld [vmem:[%s1657 + $0x18] sm:$0xff]
    %v1662 = vperm.slane %v914, 4
    %v1664 = vsel %vm38, %v1655, 0
    %v1667 = vsel %vm38, %v1656, 0
    %1669 = vmatpush.msra.mxu0 0.0
    %1670 = vmatpush.msra.mxu0 0.0
    %1671 = vmatpush.msra.mxu0 0.0
    %1672 = vmatpush.msra.mxu0 0.0
    %1673 = vmatpush.msra.mxu0 0.0
    %1674 = vmatpush.msra.mxu0 0.0
    %1675 = vmatpush.msra.mxu0 0.0
    %1676 = vmatpush.msra.mxu0 0.0
    %1677 = vmatpush.msra.mxu0 0.0
    %1678 = vmatpush.msra.mxu0 0.0
    %1679 = vmatpush.msra.mxu0 0.0
    %1680 = vmatpush.msra.mxu0 0.0
    %1681 = vmatpush.msra.mxu0 %v1661
    %1682 = vmatpush.msra.mxu0 %v1660
    %1683 = vmatpush.msra.mxu0 %v1659
    %1684 = vmatpush.msra.mxu0 %v1658
    %1685 = vmatmul.f32.gmra.mxu0 %v1664
    %v1686 = vpop.f32.mrf.mxu0
    %v1687 = vadd.f32 %v1662, %v1686
    %1688 = vmatmul.f32.gmra.mxu0 %v1667
    %v1689 = vpop.f32.mrf.mxu0
    %v1690 = vadd.f32 %v1662, %v1689
    %1691 = vdwg.mxu0
    %v1692 = vmax.f32 %v1687, 0.0
    %v1693 = vmax.f32 %v1690, 0.0
    %s1694 = scalar_lea.vmem %s4, 64
    %v1695 = vld [vmem:[%s1694] sm:$0xff]
    %v1696 = vld [vmem:[%s1694 + $0x8] sm:$0xff]
    %v1697 = vld [vmem:[%s1694 + $0x10] sm:$0xff]
    %v1698 = vld [vmem:[%s1694 + $0x18] sm:$0xff]
    %v1699 = vld [vmem:[%s1694 + $0x20] sm:$0xff]
    %v1700 = vld [vmem:[%s1694 + $0x28] sm:$0xff]
    %v1701 = vld [vmem:[%s1694 + $0x30] sm:$0xff]
    %v1702 = vld [vmem:[%s1694 + $0x38] sm:$0xff]
    %v1703 = vperm.slane %v914, 5
    %v1705 = vsel %vm827, %v1692, 0
    %v1708 = vsel %vm827, %v1693, 0
    %1710 = vmatpush.msra.mxu0 0.0
    %1711 = vmatpush.msra.mxu0 0.0
    %1712 = vmatpush.msra.mxu0 0.0
    %1713 = vmatpush.msra.mxu0 0.0
    %1714 = vmatpush.msra.mxu0 0.0
    %1715 = vmatpush.msra.mxu0 0.0
    %1716 = vmatpush.msra.mxu0 0.0
    %1717 = vmatpush.msra.mxu0 0.0
    %1718 = vmatpush.msra.mxu0 %v1702
    %1719 = vmatpush.msra.mxu0 %v1701
    %1720 = vmatpush.msra.mxu0 %v1700
    %1721 = vmatpush.msra.mxu0 %v1699
    %1722 = vmatpush.msra.mxu0 %v1698
    %1723 = vmatpush.msra.mxu0 %v1697
    %1724 = vmatpush.msra.mxu0 %v1696
    %1725 = vmatpush.msra.mxu0 %v1695
    %1726 = vmatmul.f32.gmra.mxu0 %v1705
    %v1727 = vpop.f32.mrf.mxu0
    %v1728 = vadd.f32 %v1703, %v1727
    %1729 = vmatmul.f32.gmra.mxu0 %v1708
    %v1730 = vpop.f32.mrf.mxu0
    %v1731 = vadd.f32 %v1703, %v1730
    %1732 = vdwg.mxu0
    %v1733 = vadd.f32 %v1655, %v1728
    %v1734 = vadd.f32 %v1656, %v1731
    %v1735 = vsel %vm38, %v1733, 0.0
    %1736 = vadd.xlane.f32.xlu0 %v1735
    %v1737 = vpop.xlane.xlu0 %1736
    %v1738 = vsel %vm38, %v1734, 0.0
    %1739 = vadd.xlane.f32.xlu0 %v1738
    %v1740 = vpop.xlane.xlu0 %1739
    %v1741 = vmul.f32 %v1737, %v733
    %v1742 = vmul.f32 %v1740, %v733
    %v1743 = vmul.f32 %v1733, %v1733
    %v1744 = vmul.f32 %v1734, %v1734
    %v1745 = vsel %vm38, %v1743, 0.0
    %1746 = vadd.xlane.f32.xlu0 %v1745
    %v1747 = vpop.xlane.xlu0 %1746
    %v1748 = vsel %vm38, %v1744, 0.0
    %1749 = vadd.xlane.f32.xlu0 %v1748
    %v1750 = vpop.xlane.xlu0 %1749
    %v1751 = vmul.f32 %v1747, %v733
    %v1752 = vmul.f32 %v1750, %v733
    %v1753 = vmul.f32 %v1741, %v1741
    %v1754 = vmul.f32 %v1742, %v1742
    %v1755 = vsub.f32 %v1751, %v1753
    %v1756 = vsub.f32 %v1752, %v1754
    %v1757 = vsub.f32 %v1733, %v1741
    %v1758 = vsub.f32 %v1734, %v1742
    %v1759 = vadd.f32 %v1755, 1e-05
    %v1760 = vadd.f32 %v1756, 1e-05
    %v1761 = vrsqrt.pop %v1759
    %v1762 = vmul.f32 %v1761, %v1759
    %v1763 = vmul.f32 %v1762, %v1761
    %v1764 = vmul.f32 0.5, %v1763
    %v1765 = vsub.f32 1.5, %v1764
    %v1766 = vmul.f32 %v1761, %v1765
    %vm1767 = vweird.f32 %v1759
    %vm1768 = vweird.f32 %v1761
    %vm1769 = vmor %vm1767, %vm1768
    %v1770 = vsel %vm1769, %v1761, %v1766
    %v1771 = vrsqrt.pop %v1760
    %v1772 = vmul.f32 %v1771, %v1760
    %v1773 = vmul.f32 %v1772, %v1771
    %v1774 = vmul.f32 0.5, %v1773
    %v1775 = vsub.f32 1.5, %v1774
    %v1776 = vmul.f32 %v1771, %v1775
    %vm1777 = vweird.f32 %v1760
    %vm1778 = vweird.f32 %v1771
    %vm1779 = vmor %vm1777, %vm1778
    %v1780 = vsel %vm1779, %v1771, %v1776
    %v1781 = vmul.f32 %v1757, %v1770
    %v1782 = vmul.f32 %v1758, %v1780
    %v1783 = vperm.slane %v914, 6
    %v1784 = vmul.f32 %v1781, %v1783
    %v1785 = vmul.f32 %v1782, %v1783
    %v1786 = vperm.slane %v914, 7
    %v1787 = vadd.f32 %v1784, %v1786
    %v1788 = vadd.f32 %v1785, %v1786
    %v1789 = vld [vmem:[%s6] sm:$0xff]
    %v1790 = vld [vmem:[%s6 + $0x8] sm:$0xff]
    %v1791 = vld [vmem:[%s6 + $0x10] sm:$0xff]
    %v1792 = vld [vmem:[%s6 + $0x18] sm:$0xff]
    %v1793 = vld [vmem:[%s7] sm:$0x1]
    %v1795 = vperm.slane %v1793, 0
    %v1798 = vsel %vm38, %v1787, 0
    %v1801 = vsel %vm38, %v1788, 0
    %1803 = vmatpush.msra.mxu0 0.0
    %1804 = vmatpush.msra.mxu0 0.0
    %1805 = vmatpush.msra.mxu0 0.0
    %1806 = vmatpush.msra.mxu0 0.0
    %1807 = vmatpush.msra.mxu0 0.0
    %1808 = vmatpush.msra.mxu0 0.0
    %1809 = vmatpush.msra.mxu0 0.0
    %1810 = vmatpush.msra.mxu0 0.0
    %1811 = vmatpush.msra.mxu0 0.0
    %1812 = vmatpush.msra.mxu0 0.0
    %1813 = vmatpush.msra.mxu0 0.0
    %1814 = vmatpush.msra.mxu0 0.0
    %1815 = vmatpush.msra.mxu0 %v1792
    %1816 = vmatpush.msra.mxu0 %v1791
    %1817 = vmatpush.msra.mxu0 %v1790
    %1818 = vmatpush.msra.mxu0 %v1789
    %1819 = vmatmul.f32.gmra.mxu0 %v1798
    %v1820 = vpop.f32.mrf.mxu0
    %v1821 = vadd.f32 %v1795, %v1820
    %1822 = vmatmul.f32.gmra.mxu0 %v1801
    %v1823 = vpop.f32.mrf.mxu0
    %v1824 = vadd.f32 %v1795, %v1823
    %1825 = vdwg.mxu0
    %vm1826 = vcmask 130048
    %1827 = vst.msk [vmem:[#allocation2] sm:$0xff] %vm1826, %v1821
    %1828 = vst.msk [vmem:[#allocation2 + $0x8] sm:$0xff] %vm1826, %v1824
    // Predicated region
    $region34: #{tpu_custom_call.1} parent=1 // pred_check
      _
    $region35: #{tpu_custom_call.1} parent=1 // pred_check_branch
      %1830 = sbr.rel (0) target = $region37
    $region36: #{tpu_custom_call.1} parent=1 // pred_region
      %1832 = vsyncadd [#allocation3], 0
      %s1833 = sshll.u32 [#allocation2], 4
      %s1834 = int_to_ptr.vmem [resolvable:$true] %s1833
      %s1835 = sshll.u32 %s8, 4
      %s1836 = int_to_ptr.hbm [resolvable:$true] %s1835
      %1841 = dma.vmem_to_hbm [thread:$0]  %s1834, 256, %s1836, [#allocation3], 128, 128, 8
    $region37: #{tpu_custom_call.1} parent=1 // pred_fallthru
      _
    // Predicated region
    $region38: #{tpu_custom_call.1} parent=1 // pred_check
      _
    $region39: #{tpu_custom_call.1} parent=1 // pred_check_branch
      %1843 = sbr.rel (0) target = $region41
    $region40: #{tpu_custom_call.1} parent=1 // pred_region
      %1845 = dma.done [#allocation3], 256
    $region41: #{tpu_custom_call.1} parent=1 // pred_fallthru
      _
    %1846 = vsyncpa [#allocation3], 1

</llo_original>
